<compile_context>
chip_gen: v7x
topology: tpu7x:2x2x1
jax: 0.10.0
libtpu: 0.0.40
codegen_flags: <defaults>
</compile_context>

<pallas_src>
import functools

import numpy as np
import jax
import jax.numpy as jnp
from jax import lax
from jax.experimental import pallas as pl
from jax.experimental.pallas import tpu as pltpu


def _round_up(n, m):
    return ((n + m - 1) // m) * m


def _pick_vmem_limit():
    # v5e/v6e have 128 MiB physical VMEM: let whole (or several) images stay resident.
    # Elsewhere (e.g. v7x, 64 MiB) keep the conservative default.
    try:
        cap = pltpu.get_tpu_info().vmem_capacity_bytes
    except Exception:
        cap = 0
    if cap >= 128 * 1024 * 1024:
        return 96 * 1024 * 1024
    return 32 * 1024 * 1024


def _resblock_kernel(x_ref, w1_ref, b1_ref, w2_ref, b2_ref, mask_ref,
                     out_ref, slab_ref, xext_ref, zext_ref,
                     *, C, Cp, H, W, K, P, Wp, HWpad, ROW0):
    """One grid step == one image, fully VMEM resident.

    Layout: channels on sublanes, zero-padded (H+2P, W+2P)-flattened spatial on lanes.

    x_ref   : (1, C, H*W)     f32   unpadded flattened input image.
    w1/w2   : (Cp, K*K*Cp)    bf16  fused im2col weights, column order (dy, dx, ci).
    b1/b2   : (Cp, 1)         f32   conv biases (zero-padded channels).
    mask    : (1, HWpad)      f32   interior mask (zeros on pad columns + align tail).
    out_ref : (1, Cp, HWpad)  f32   lane-dense padded-layout output.
    slab    : (K*K*Cp, HWpad) bf16  im2col slab scratch.
    xext    : (Cp, LEXT)      f32   zero-padded x staging (f32 -> exact residual).
    zext    : (Cp, LEXT)      bf16  zero-padded z staging.
    """
    # --- per-step zero of both staging buffers: establishes halo rows, pad columns,
    # pad channels and the alignment tail as true zeros.  Cheap, and keeps the kernel
    # correct under megacore sharding (scratch is per-core and otherwise stale).
    xext_ref[...] = jnp.zeros(xext_ref.shape, xext_ref.dtype)
    zext_ref[...] = jnp.zeros(zext_ref.shape, zext_ref.dtype)

    # --- stage x (W-dense flat) into the zero-padded (H+2P, Wp) flattened layout.
    # Per-row lane-offset copies; everything not written stays zero == 'same' padding.
    for h in range(H):
        dst = ROW0 + h * Wp
        xext_ref[:C, dst:dst + W] = x_ref[0, :, h * W:h * W + W]

    def build_slab(ext_ref, needs_cast):
        # slab[(dy*K+dx)*Cp + c, q] = ext[c, q + dy*Wp + dx]
        # Every tap is a pure lane-offset slice of the zero-padded image: no strided
        # 2-D windows, no per-tap masks.  The slab is bf16; values are cast per block
        # as they are stored (no separate whole-slab cast pass).
        for dy in range(K):
            for dx in range(K):
                t = dy * Wp + dx
                blk = ext_ref[:, t:t + HWpad]
                if needs_cast:
                    blk = blk.astype(jnp.bfloat16)
                r0 = (dy * K + dx) * Cp                      # multiple of 16 -> aligned
                slab_ref[r0:r0 + Cp, :] = blk

    # ---- conv1: ONE MXU matmul over the fused K*K*Cp contraction (bf16 x bf16 -> f32).
    build_slab(xext_ref, needs_cast=True)
    y1 = jnp.dot(w1_ref[...], slab_ref[...], preferred_element_type=jnp.float32)
    # bias + ReLU in f32; one interior-mask multiply zeroes the Wp padding columns and
    # the lane-alignment tail (replaces the old 2*K*(K-1) per-tap colmask multiplies).
    z = jnp.maximum(y1 + b1_ref[...], 0.0) * mask_ref[...]

    # ---- stage z (bf16) into the padded layout: a single lane-offset store.  The
    # masked zeros land exactly on the padding columns, so zext == zero-padded z.
    zext_ref[:, ROW0:ROW0 + HWpad] = z.astype(jnp.bfloat16)

    # ---- conv2 (no casts: bf16 staging feeds the bf16 slab directly).
    build_slab(zext_ref, needs_cast=False)
    y2 = jnp.dot(w2_ref[...], slab_ref[...], preferred_element_type=jnp.float32)

    # ---- residual add (f32, layout-aligned slice of the x staging) + final ReLU;
    # lane-dense (Cp, HWpad) store.
    x_res = xext_ref[:, ROW0:ROW0 + HWpad]
    out_ref[0] = jnp.maximum(y2 + b2_ref[...] + x_res, 0.0).astype(out_ref.dtype)


def resblock_pallas(x_nchw, w1_oihw, b1, w2_oihw, b2, *, kernel_size):
    """ResBlock forward matching the PyTorch module (stride-1 'same' convs).

    x_nchw : (B, C, H, W) f32,  w*_oihw : (C, C, K, K) (PyTorch conv layout),
    b*     : (C,).  Returns (B, C, H, W) f32.
    """
    B, C, H, W = x_nchw.shape
    K = kernel_size
    assert K % 2 == 1, "ResBlock uses padding=(K-1)//2 -> odd kernel_size only"
    P = (K - 1) // 2
    Wp = W + 2 * P                      # padded row width
    HW = H * W
    HWp = H * Wp
    HWpad = _round_up(HWp, 128)         # lane-dense matmul N / output stores
    Cp = _round_up(C, 16)               # bf16 sublane-pack aligned slab row offsets
    ROW0 = P * Wp + P                   # lane where x[0, 0] lives in the padded layout
    LEXT = _round_up(2 * P * Wp + 2 * P + HWpad, 128)
    KKC = K * K * Cp

    # ---- XLA-side glue: pure layout, NO padded copy of the activations.
    x_flat = x_nchw.reshape(B, C, HW)

    # Fused im2col weight matrices, channel-padded: Wm[o, (dy*K+dx)*Cp + i] = w[o,i,dy,dx].
    def fuse_w(w):
        wp = jnp.zeros((Cp, Cp, K, K), w.dtype).at[:C, :C].set(w)
        return jnp.transpose(wp, (0, 2, 3, 1)).reshape(Cp, KKC).astype(jnp.bfloat16)

    def fuse_b(b):
        return jnp.zeros((Cp, 1), jnp.float32).at[:C, 0].set(b.astype(jnp.float32))

    w1m, w2m = fuse_w(w1_oihw), fuse_w(w2_oihw)
    b1c, b2c = fuse_b(b1), fuse_b(b2)

    # Interior mask: 1 on real output columns, 0 on the Wp padding columns and on the
    # lane-alignment tail.
    q = np.arange(HWpad)
    mask = ((q < HWp) & ((q % Wp) < W)).astype(np.float32).reshape(1, HWpad)
    mask = jnp.asarray(mask)

    kernel = functools.partial(_resblock_kernel, C=C, Cp=Cp, H=H, W=W, K=K, P=P,
                               Wp=Wp, HWpad=HWpad, ROW0=ROW0)

    out_pad = pl.pallas_call(
        kernel,
        out_shape=jax.ShapeDtypeStruct((B, Cp, HWpad), jnp.float32),
        grid_spec=pltpu.PrefetchScalarGridSpec(
            num_scalar_prefetch=0,
            grid=(B,),                                   # one whole image per grid step
            in_specs=[
                pl.BlockSpec((1, C, HW), lambda b: (b, 0, 0)),      # unpadded image
                pl.BlockSpec((Cp, KKC), lambda b: (0, 0)),          # w1 (bf16)
                pl.BlockSpec((Cp, 1), lambda b: (0, 0)),            # b1
                pl.BlockSpec((Cp, KKC), lambda b: (0, 0)),          # w2 (bf16)
                pl.BlockSpec((Cp, 1), lambda b: (0, 0)),            # b2
                pl.BlockSpec((1, HWpad), lambda b: (0, 0)),         # interior mask
            ],
            out_specs=pl.BlockSpec((1, Cp, HWpad), lambda b: (b, 0, 0)),
            scratch_shapes=[
                pltpu.VMEM((KKC, HWpad), jnp.bfloat16),   # im2col slab (bf16)
                pltpu.VMEM((Cp, LEXT), jnp.float32),      # padded x staging (f32)
                pltpu.VMEM((Cp, LEXT), jnp.bfloat16),     # padded z staging (bf16)
            ],
        ),
        compiler_params=pltpu.CompilerParams(
            dimension_semantics=("parallel",),            # batch -> megacore cores
            vmem_limit_bytes=_pick_vmem_limit(),
        ),
    )(x_flat, w1m, b1c, w2m, b2c, mask)

    # Strip channel padding, Wp padding columns and the alignment tail (pure XLA slice).
    out = out_pad[:, :C, :HWp].reshape(B, C, H, Wp)[:, :, :, :W]
    return out


def _reference_resblock(x_nchw, w1, b1, w2, b2):
    """Pure-JAX f32 reference (lax.conv) for correctness checking."""
    dn = lax.conv_dimension_numbers(x_nchw.shape, w1.shape, ("NCHW", "OIHW", "NCHW"))

    def conv(x, w, b):
        y = lax.conv_general_dilated(x, w, (1, 1), "SAME", dimension_numbers=dn)
        return y + b.reshape(1, -1, 1, 1)

    z = jax.nn.relu(conv(x_nchw, w1, b1))
    z = conv(z, w2, b2)
    return jax.nn.relu(x_nchw + z)


if __name__ == "__main__":
    B, C, H, W = 2, 4, 16, 16
    K = 3

    key = jax.random.PRNGKey(0)
    kx, k1, k2, k3, k4 = jax.random.split(key, 5)

    x = jax.random.normal(kx, (B, C, H, W), jnp.float32)
    fan_in = C * K * K
    scale = 1.0 / jnp.sqrt(fan_in)
    # Conv parameters in PyTorch OIHW layout, small scale.
    w1 = jax.random.normal(k1, (C, C, K, K), jnp.float32) * scale
    b1 = jax.random.normal(k2, (C,), jnp.float32) * scale
    w2 = jax.random.normal(k3, (C, C, K, K), jnp.float32) * scale
    b2 = jax.random.normal(k4, (C,), jnp.float32) * scale

    out = resblock_pallas(x, w1, b1, w2, b2, kernel_size=K)
    out = jax.block_until_ready(out)

    ref = _reference_resblock(x, w1, b1, w2, b2)
    assert out.shape == (B, C, H, W)
    # bf16 MXU operands with f32 accumulation -> allow a few e-2 deviation vs f32 ref.
    err = float(jnp.max(jnp.abs(out - ref)))
    assert err < 5e-2, f"mismatch vs reference: max abs err = {err}"

    print("KERNEL_OK")
</pallas_src>

<mosaic_0001>
module attributes {stable_mosaic.version = 11 : i64} {
  func.func @_resblock_kernel(%arg0: i32, %arg1: memref<1x4x256xf32, #tpu.memory_space<vmem>>, %arg2: memref<16x144xbf16, #tpu.memory_space<vmem>>, %arg3: memref<16x1xf32, #tpu.memory_space<vmem>>, %arg4: memref<16x144xbf16, #tpu.memory_space<vmem>>, %arg5: memref<16x1xf32, #tpu.memory_space<vmem>>, %arg6: memref<1x384xf32, #tpu.memory_space<vmem>>, %arg7: memref<1x16x384xf32, #tpu.memory_space<vmem>>, %arg8: memref<144x384xbf16, #tpu.memory_space<vmem>>, %arg9: memref<16x512xf32, #tpu.memory_space<vmem>>, %arg10: memref<16x512xbf16, #tpu.memory_space<vmem>>) attributes {dimension_semantics = [#tpu.dimension_semantics<parallel>], iteration_bounds = array<i64: 2>, scalar_prefetch = 0 : i64, scratch_operands = 3 : i64, tpu.core_type = #tpu.core_type<tc>, window_params = [{transform_indices = @transform_0, window_bounds = array<i64: 1, 4, 256>}, {pipeline_mode = #tpu.pipeline_mode<synchronous>, transform_indices = @transform_1, window_bounds = array<i64: 16, 144>}, {pipeline_mode = #tpu.pipeline_mode<synchronous>, transform_indices = @transform_2, window_bounds = array<i64: 16, 1>}, {pipeline_mode = #tpu.pipeline_mode<synchronous>, transform_indices = @transform_3, window_bounds = array<i64: 16, 144>}, {pipeline_mode = #tpu.pipeline_mode<synchronous>, transform_indices = @transform_4, window_bounds = array<i64: 16, 1>}, {pipeline_mode = #tpu.pipeline_mode<synchronous>, transform_indices = @transform_5, window_bounds = array<i64: 1, 384>}, {transform_indices = @transform_6, window_bounds = array<i64: 1, 16, 384>}]} {
    %cst = arith.constant 0.000000e+00 : f32
    %0 = vector.broadcast %cst : f32 to vector<16x512xf32>
    %c0 = arith.constant 0 : index
    %c0_0 = arith.constant 0 : index
    %1 = vector.load %arg9[%c0, %c0_0] : memref<16x512xf32, #tpu.memory_space<vmem>>, vector<16x512xf32>
    tpu.vector_store %arg9[%c0, %c0_0], %0 {strides = array<i32>} : memref<16x512xf32, #tpu.memory_space<vmem>>, vector<16x512xf32>,
    %cst_1 = arith.constant 0.000000e+00 : bf16
    %2 = vector.broadcast %cst_1 : bf16 to vector<16x512xbf16>
    %c0_2 = arith.constant 0 : index
    %c0_3 = arith.constant 0 : index
    %3 = vector.load %arg10[%c0_2, %c0_3] : memref<16x512xbf16, #tpu.memory_space<vmem>>, vector<16x512xbf16>
    tpu.vector_store %arg10[%c0_2, %c0_3], %2 {strides = array<i32>} : memref<16x512xbf16, #tpu.memory_space<vmem>>, vector<16x512xbf16>,
    %c0_4 = arith.constant 0 : index
    %c0_5 = arith.constant 0 : index
    %c0_6 = arith.constant 0 : index
    %4 = vector.load %arg1[%c0_4, %c0_5, %c0_6] : memref<1x4x256xf32, #tpu.memory_space<vmem>>, vector<1x4x16xf32>
    %5 = vector.shape_cast %4 : vector<1x4x16xf32> to vector<4x16xf32>
    %c0_7 = arith.constant 0 : index
    %c19 = arith.constant 19 : index
    %6 = vector.load %arg9[%c0_7, %c19] : memref<16x512xf32, #tpu.memory_space<vmem>>, vector<4x16xf32>
    tpu.vector_store %arg9[%c0_7, %c19], %5 {strides = array<i32>} : memref<16x512xf32, #tpu.memory_space<vmem>>, vector<4x16xf32>,
    %c0_8 = arith.constant 0 : index
    %c0_9 = arith.constant 0 : index
    %c16 = arith.constant 16 : index
    %7 = vector.load %arg1[%c0_8, %c0_9, %c16] : memref<1x4x256xf32, #tpu.memory_space<vmem>>, vector<1x4x16xf32>
    %8 = vector.shape_cast %7 : vector<1x4x16xf32> to vector<4x16xf32>
    %c0_10 = arith.constant 0 : index
    %c37 = arith.constant 37 : index
    %9 = vector.load %arg9[%c0_10, %c37] : memref<16x512xf32, #tpu.memory_space<vmem>>, vector<4x16xf32>
    tpu.vector_store %arg9[%c0_10, %c37], %8 {strides = array<i32>} : memref<16x512xf32, #tpu.memory_space<vmem>>, vector<4x16xf32>,
    %c0_11 = arith.constant 0 : index
    %c0_12 = arith.constant 0 : index
    %c32 = arith.constant 32 : index
    %10 = vector.load %arg1[%c0_11, %c0_12, %c32] : memref<1x4x256xf32, #tpu.memory_space<vmem>>, vector<1x4x16xf32>
    %11 = vector.shape_cast %10 : vector<1x4x16xf32> to vector<4x16xf32>
    %c0_13 = arith.constant 0 : index
    %c55 = arith.constant 55 : index
    %12 = vector.load %arg9[%c0_13, %c55] : memref<16x512xf32, #tpu.memory_space<vmem>>, vector<4x16xf32>
    tpu.vector_store %arg9[%c0_13, %c55], %11 {strides = array<i32>} : memref<16x512xf32, #tpu.memory_space<vmem>>, vector<4x16xf32>,
    %c0_14 = arith.constant 0 : index
    %c0_15 = arith.constant 0 : index
    %c48 = arith.constant 48 : index
    %13 = vector.load %arg1[%c0_14, %c0_15, %c48] : memref<1x4x256xf32, #tpu.memory_space<vmem>>, vector<1x4x16xf32>
    %14 = vector.shape_cast %13 : vector<1x4x16xf32> to vector<4x16xf32>
    %c0_16 = arith.constant 0 : index
    %c73 = arith.constant 73 : index
    %15 = vector.load %arg9[%c0_16, %c73] : memref<16x512xf32, #tpu.memory_space<vmem>>, vector<4x16xf32>
    tpu.vector_store %arg9[%c0_16, %c73], %14 {strides = array<i32>} : memref<16x512xf32, #tpu.memory_space<vmem>>, vector<4x16xf32>,
    %c0_17 = arith.constant 0 : index
    %c0_18 = arith.constant 0 : index
    %c64 = arith.constant 64 : index
    %16 = vector.load %arg1[%c0_17, %c0_18, %c64] : memref<1x4x256xf32, #tpu.memory_space<vmem>>, vector<1x4x16xf32>
    %17 = vector.shape_cast %16 : vector<1x4x16xf32> to vector<4x16xf32>
    %c0_19 = arith.constant 0 : index
    %c91 = arith.constant 91 : index
    %18 = vector.load %arg9[%c0_19, %c91] : memref<16x512xf32, #tpu.memory_space<vmem>>, vector<4x16xf32>
    tpu.vector_store %arg9[%c0_19, %c91], %17 {strides = array<i32>} : memref<16x512xf32, #tpu.memory_space<vmem>>, vector<4x16xf32>,
    %c0_20 = arith.constant 0 : index
    %c0_21 = arith.constant 0 : index
    %c80 = arith.constant 80 : index
    %19 = vector.load %arg1[%c0_20, %c0_21, %c80] : memref<1x4x256xf32, #tpu.memory_space<vmem>>, vector<1x4x16xf32>
    %20 = vector.shape_cast %19 : vector<1x4x16xf32> to vector<4x16xf32>
    %c0_22 = arith.constant 0 : index
    %c109 = arith.constant 109 : index
    %21 = vector.load %arg9[%c0_22, %c109] : memref<16x512xf32, #tpu.memory_space<vmem>>, vector<4x16xf32>
    tpu.vector_store %arg9[%c0_22, %c109], %20 {strides = array<i32>} : memref<16x512xf32, #tpu.memory_space<vmem>>, vector<4x16xf32>,
    %c0_23 = arith.constant 0 : index
    %c0_24 = arith.constant 0 : index
    %c96 = arith.constant 96 : index
    %22 = vector.load %arg1[%c0_23, %c0_24, %c96] : memref<1x4x256xf32, #tpu.memory_space<vmem>>, vector<1x4x16xf32>
    %23 = vector.shape_cast %22 : vector<1x4x16xf32> to vector<4x16xf32>
    %c0_25 = arith.constant 0 : index
    %c127 = arith.constant 127 : index
    %24 = vector.load %arg9[%c0_25, %c127] : memref<16x512xf32, #tpu.memory_space<vmem>>, vector<4x16xf32>
    tpu.vector_store %arg9[%c0_25, %c127], %23 {strides = array<i32>} : memref<16x512xf32, #tpu.memory_space<vmem>>, vector<4x16xf32>,
    %c0_26 = arith.constant 0 : index
    %c0_27 = arith.constant 0 : index
    %c112 = arith.constant 112 : index
    %25 = vector.load %arg1[%c0_26, %c0_27, %c112] : memref<1x4x256xf32, #tpu.memory_space<vmem>>, vector<1x4x16xf32>
    %26 = vector.shape_cast %25 : vector<1x4x16xf32> to vector<4x16xf32>
    %c0_28 = arith.constant 0 : index
    %c145 = arith.constant 145 : index
    %27 = vector.load %arg9[%c0_28, %c145] : memref<16x512xf32, #tpu.memory_space<vmem>>, vector<4x16xf32>
    tpu.vector_store %arg9[%c0_28, %c145], %26 {strides = array<i32>} : memref<16x512xf32, #tpu.memory_space<vmem>>, vector<4x16xf32>,
    %c0_29 = arith.constant 0 : index
    %c0_30 = arith.constant 0 : index
    %c128 = arith.constant 128 : index
    %28 = vector.load %arg1[%c0_29, %c0_30, %c128] : memref<1x4x256xf32, #tpu.memory_space<vmem>>, vector<1x4x16xf32>
    %29 = vector.shape_cast %28 : vector<1x4x16xf32> to vector<4x16xf32>
    %c0_31 = arith.constant 0 : index
    %c163 = arith.constant 163 : index
    %30 = vector.load %arg9[%c0_31, %c163] : memref<16x512xf32, #tpu.memory_space<vmem>>, vector<4x16xf32>
    tpu.vector_store %arg9[%c0_31, %c163], %29 {strides = array<i32>} : memref<16x512xf32, #tpu.memory_space<vmem>>, vector<4x16xf32>,
    %c0_32 = arith.constant 0 : index
    %c0_33 = arith.constant 0 : index
    %c144 = arith.constant 144 : index
    %31 = vector.load %arg1[%c0_32, %c0_33, %c144] : memref<1x4x256xf32, #tpu.memory_space<vmem>>, vector<1x4x16xf32>
    %32 = vector.shape_cast %31 : vector<1x4x16xf32> to vector<4x16xf32>
    %c0_34 = arith.constant 0 : index
    %c181 = arith.constant 181 : index
    %33 = vector.load %arg9[%c0_34, %c181] : memref<16x512xf32, #tpu.memory_space<vmem>>, vector<4x16xf32>
    tpu.vector_store %arg9[%c0_34, %c181], %32 {strides = array<i32>} : memref<16x512xf32, #tpu.memory_space<vmem>>, vector<4x16xf32>,
    %c0_35 = arith.constant 0 : index
    %c0_36 = arith.constant 0 : index
    %c160 = arith.constant 160 : index
    %34 = vector.load %arg1[%c0_35, %c0_36, %c160] : memref<1x4x256xf32, #tpu.memory_space<vmem>>, vector<1x4x16xf32>
    %35 = vector.shape_cast %34 : vector<1x4x16xf32> to vector<4x16xf32>
    %c0_37 = arith.constant 0 : index
    %c199 = arith.constant 199 : index
    %36 = vector.load %arg9[%c0_37, %c199] : memref<16x512xf32, #tpu.memory_space<vmem>>, vector<4x16xf32>
    tpu.vector_store %arg9[%c0_37, %c199], %35 {strides = array<i32>} : memref<16x512xf32, #tpu.memory_space<vmem>>, vector<4x16xf32>,
    %c0_38 = arith.constant 0 : index
    %c0_39 = arith.constant 0 : index
    %c176 = arith.constant 176 : index
    %37 = vector.load %arg1[%c0_38, %c0_39, %c176] : memref<1x4x256xf32, #tpu.memory_space<vmem>>, vector<1x4x16xf32>
    %38 = vector.shape_cast %37 : vector<1x4x16xf32> to vector<4x16xf32>
    %c0_40 = arith.constant 0 : index
    %c217 = arith.constant 217 : index
    %39 = vector.load %arg9[%c0_40, %c217] : memref<16x512xf32, #tpu.memory_space<vmem>>, vector<4x16xf32>
    tpu.vector_store %arg9[%c0_40, %c217], %38 {strides = array<i32>} : memref<16x512xf32, #tpu.memory_space<vmem>>, vector<4x16xf32>,
    %c0_41 = arith.constant 0 : index
    %c0_42 = arith.constant 0 : index
    %c192 = arith.constant 192 : index
    %40 = vector.load %arg1[%c0_41, %c0_42, %c192] : memref<1x4x256xf32, #tpu.memory_space<vmem>>, vector<1x4x16xf32>
    %41 = vector.shape_cast %40 : vector<1x4x16xf32> to vector<4x16xf32>
    %c0_43 = arith.constant 0 : index
    %c235 = arith.constant 235 : index
    %42 = vector.load %arg9[%c0_43, %c235] : memref<16x512xf32, #tpu.memory_space<vmem>>, vector<4x16xf32>
    tpu.vector_store %arg9[%c0_43, %c235], %41 {strides = array<i32>} : memref<16x512xf32, #tpu.memory_space<vmem>>, vector<4x16xf32>,
    %c0_44 = arith.constant 0 : index
    %c0_45 = arith.constant 0 : index
    %c208 = arith.constant 208 : index
    %43 = vector.load %arg1[%c0_44, %c0_45, %c208] : memref<1x4x256xf32, #tpu.memory_space<vmem>>, vector<1x4x16xf32>
    %44 = vector.shape_cast %43 : vector<1x4x16xf32> to vector<4x16xf32>
    %c0_46 = arith.constant 0 : index
    %c253 = arith.constant 253 : index
    %45 = vector.load %arg9[%c0_46, %c253] : memref<16x512xf32, #tpu.memory_space<vmem>>, vector<4x16xf32>
    tpu.vector_store %arg9[%c0_46, %c253], %44 {strides = array<i32>} : memref<16x512xf32, #tpu.memory_space<vmem>>, vector<4x16xf32>,
    %c0_47 = arith.constant 0 : index
    %c0_48 = arith.constant 0 : index
    %c224 = arith.constant 224 : index
    %46 = vector.load %arg1[%c0_47, %c0_48, %c224] : memref<1x4x256xf32, #tpu.memory_space<vmem>>, vector<1x4x16xf32>
    %47 = vector.shape_cast %46 : vector<1x4x16xf32> to vector<4x16xf32>
    %c0_49 = arith.constant 0 : index
    %c271 = arith.constant 271 : index
    %48 = vector.load %arg9[%c0_49, %c271] : memref<16x512xf32, #tpu.memory_space<vmem>>, vector<4x16xf32>
    tpu.vector_store %arg9[%c0_49, %c271], %47 {strides = array<i32>} : memref<16x512xf32, #tpu.memory_space<vmem>>, vector<4x16xf32>,
    %c0_50 = arith.constant 0 : index
    %c0_51 = arith.constant 0 : index
    %c240 = arith.constant 240 : index
    %49 = vector.load %arg1[%c0_50, %c0_51, %c240] : memref<1x4x256xf32, #tpu.memory_space<vmem>>, vector<1x4x16xf32>
    %50 = vector.shape_cast %49 : vector<1x4x16xf32> to vector<4x16xf32>
    %c0_52 = arith.constant 0 : index
    %c289 = arith.constant 289 : index
    %51 = vector.load %arg9[%c0_52, %c289] : memref<16x512xf32, #tpu.memory_space<vmem>>, vector<4x16xf32>
    tpu.vector_store %arg9[%c0_52, %c289], %50 {strides = array<i32>} : memref<16x512xf32, #tpu.memory_space<vmem>>, vector<4x16xf32>,
    %c0_53 = arith.constant 0 : index
    %c0_54 = arith.constant 0 : index
    %52 = vector.load %arg9[%c0_53, %c0_54] : memref<16x512xf32, #tpu.memory_space<vmem>>, vector<16x384xf32>
    %53 = arith.truncf %52 : vector<16x384xf32> to vector<16x384xbf16>
    %c0_55 = arith.constant 0 : index
    %c0_56 = arith.constant 0 : index
    %54 = vector.load %arg8[%c0_55, %c0_56] : memref<144x384xbf16, #tpu.memory_space<vmem>>, vector<16x384xbf16>
    tpu.vector_store %arg8[%c0_55, %c0_56], %53 {strides = array<i32>} : memref<144x384xbf16, #tpu.memory_space<vmem>>, vector<16x384xbf16>,
    %c0_57 = arith.constant 0 : index
    %c1 = arith.constant 1 : index
    %55 = vector.load %arg9[%c0_57, %c1] : memref<16x512xf32, #tpu.memory_space<vmem>>, vector<16x384xf32>
    %56 = arith.truncf %55 : vector<16x384xf32> to vector<16x384xbf16>
    %c16_58 = arith.constant 16 : index
    %c0_59 = arith.constant 0 : index
    %57 = vector.load %arg8[%c16_58, %c0_59] : memref<144x384xbf16, #tpu.memory_space<vmem>>, vector<16x384xbf16>
    tpu.vector_store %arg8[%c16_58, %c0_59], %56 {strides = array<i32>} : memref<144x384xbf16, #tpu.memory_space<vmem>>, vector<16x384xbf16>,
    %c0_60 = arith.constant 0 : index
    %c2 = arith.constant 2 : index
    %58 = vector.load %arg9[%c0_60, %c2] : memref<16x512xf32, #tpu.memory_space<vmem>>, vector<16x384xf32>
    %59 = arith.truncf %58 : vector<16x384xf32> to vector<16x384xbf16>
    %c32_61 = arith.constant 32 : index
    %c0_62 = arith.constant 0 : index
    %60 = vector.load %arg8[%c32_61, %c0_62] : memref<144x384xbf16, #tpu.memory_space<vmem>>, vector<16x384xbf16>
    tpu.vector_store %arg8[%c32_61, %c0_62], %59 {strides = array<i32>} : memref<144x384xbf16, #tpu.memory_space<vmem>>, vector<16x384xbf16>,
    %c0_63 = arith.constant 0 : index
    %c18 = arith.constant 18 : index
    %61 = vector.load %arg9[%c0_63, %c18] : memref<16x512xf32, #tpu.memory_space<vmem>>, vector<16x384xf32>
    %62 = arith.truncf %61 : vector<16x384xf32> to vector<16x384xbf16>
    %c48_64 = arith.constant 48 : index
    %c0_65 = arith.constant 0 : index
    %63 = vector.load %arg8[%c48_64, %c0_65] : memref<144x384xbf16, #tpu.memory_space<vmem>>, vector<16x384xbf16>
    tpu.vector_store %arg8[%c48_64, %c0_65], %62 {strides = array<i32>} : memref<144x384xbf16, #tpu.memory_space<vmem>>, vector<16x384xbf16>,
    %c0_66 = arith.constant 0 : index
    %c19_67 = arith.constant 19 : index
    %64 = vector.load %arg9[%c0_66, %c19_67] : memref<16x512xf32, #tpu.memory_space<vmem>>, vector<16x384xf32>
    %65 = arith.truncf %64 : vector<16x384xf32> to vector<16x384xbf16>
    %c64_68 = arith.constant 64 : index
    %c0_69 = arith.constant 0 : index
    %66 = vector.load %arg8[%c64_68, %c0_69] : memref<144x384xbf16, #tpu.memory_space<vmem>>, vector<16x384xbf16>
    tpu.vector_store %arg8[%c64_68, %c0_69], %65 {strides = array<i32>} : memref<144x384xbf16, #tpu.memory_space<vmem>>, vector<16x384xbf16>,
    %c0_70 = arith.constant 0 : index
    %c20 = arith.constant 20 : index
    %67 = vector.load %arg9[%c0_70, %c20] : memref<16x512xf32, #tpu.memory_space<vmem>>, vector<16x384xf32>
    %68 = arith.truncf %67 : vector<16x384xf32> to vector<16x384xbf16>
    %c80_71 = arith.constant 80 : index
    %c0_72 = arith.constant 0 : index
    %69 = vector.load %arg8[%c80_71, %c0_72] : memref<144x384xbf16, #tpu.memory_space<vmem>>, vector<16x384xbf16>
    tpu.vector_store %arg8[%c80_71, %c0_72], %68 {strides = array<i32>} : memref<144x384xbf16, #tpu.memory_space<vmem>>, vector<16x384xbf16>,
    %c0_73 = arith.constant 0 : index
    %c36 = arith.constant 36 : index
    %70 = vector.load %arg9[%c0_73, %c36] : memref<16x512xf32, #tpu.memory_space<vmem>>, vector<16x384xf32>
    %71 = arith.truncf %70 : vector<16x384xf32> to vector<16x384xbf16>
    %c96_74 = arith.constant 96 : index
    %c0_75 = arith.constant 0 : index
    %72 = vector.load %arg8[%c96_74, %c0_75] : memref<144x384xbf16, #tpu.memory_space<vmem>>, vector<16x384xbf16>
    tpu.vector_store %arg8[%c96_74, %c0_75], %71 {strides = array<i32>} : memref<144x384xbf16, #tpu.memory_space<vmem>>, vector<16x384xbf16>,
    %c0_76 = arith.constant 0 : index
    %c37_77 = arith.constant 37 : index
    %73 = vector.load %arg9[%c0_76, %c37_77] : memref<16x512xf32, #tpu.memory_space<vmem>>, vector<16x384xf32>
    %74 = arith.truncf %73 : vector<16x384xf32> to vector<16x384xbf16>
    %c112_78 = arith.constant 112 : index
    %c0_79 = arith.constant 0 : index
    %75 = vector.load %arg8[%c112_78, %c0_79] : memref<144x384xbf16, #tpu.memory_space<vmem>>, vector<16x384xbf16>
    tpu.vector_store %arg8[%c112_78, %c0_79], %74 {strides = array<i32>} : memref<144x384xbf16, #tpu.memory_space<vmem>>, vector<16x384xbf16>,
    %c0_80 = arith.constant 0 : index
    %c38 = arith.constant 38 : index
    %76 = vector.load %arg9[%c0_80, %c38] : memref<16x512xf32, #tpu.memory_space<vmem>>, vector<16x384xf32>
    %77 = arith.truncf %76 : vector<16x384xf32> to vector<16x384xbf16>
    %c128_81 = arith.constant 128 : index
    %c0_82 = arith.constant 0 : index
    %78 = vector.load %arg8[%c128_81, %c0_82] : memref<144x384xbf16, #tpu.memory_space<vmem>>, vector<16x384xbf16>
    tpu.vector_store %arg8[%c128_81, %c0_82], %77 {strides = array<i32>} : memref<144x384xbf16, #tpu.memory_space<vmem>>, vector<16x384xbf16>,
    %c0_83 = arith.constant 0 : index
    %c0_84 = arith.constant 0 : index
    %79 = vector.load %arg2[%c0_83, %c0_84] : memref<16x144xbf16, #tpu.memory_space<vmem>>, vector<16x144xbf16>
    %c0_85 = arith.constant 0 : index
    %c0_86 = arith.constant 0 : index
    %80 = vector.load %arg8[%c0_85, %c0_86] : memref<144x384xbf16, #tpu.memory_space<vmem>>, vector<144x384xbf16>
    %cst_87 = arith.constant dense<0.000000e+00> : vector<16x384xf32>
    %81 = tpu.matmul %79, %80, %cst_87 {dimension_numbers = #tpu.dot_dimension_numbers<[1], [0], [0], [1], [0, 0, 1, 1], [], []>} : vector<16x144xbf16>, vector<144x384xbf16>, vector<16x384xf32> -> vector<16x384xf32>
    %c0_88 = arith.constant 0 : index
    %c0_89 = arith.constant 0 : index
    %82 = vector.load %arg3[%c0_88, %c0_89] : memref<16x1xf32, #tpu.memory_space<vmem>>, vector<16x1xf32>
    %83 = vector.broadcast %82 : vector<16x1xf32> to vector<16x384xf32>
    %84 = arith.addf %81, %83 : vector<16x384xf32>
    %cst_90 = arith.constant 0.000000e+00 : f32
    %85 = vector.broadcast %cst_90 : f32 to vector<16x384xf32>
    %86 = arith.maximumf %84, %85 : vector<16x384xf32>
    %c0_91 = arith.constant 0 : index
    %c0_92 = arith.constant 0 : index
    %87 = vector.load %arg6[%c0_91, %c0_92] : memref<1x384xf32, #tpu.memory_space<vmem>>, vector<1x384xf32>
    %88 = vector.broadcast %87 : vector<1x384xf32> to vector<16x384xf32>
    %89 = arith.mulf %86, %88 : vector<16x384xf32>
    %90 = arith.truncf %89 : vector<16x384xf32> to vector<16x384xbf16>
    %c0_93 = arith.constant 0 : index
    %c19_94 = arith.constant 19 : index
    %91 = vector.load %arg10[%c0_93, %c19_94] : memref<16x512xbf16, #tpu.memory_space<vmem>>, vector<16x384xbf16>
    tpu.vector_store %arg10[%c0_93, %c19_94], %90 {strides = array<i32>} : memref<16x512xbf16, #tpu.memory_space<vmem>>, vector<16x384xbf16>,
    %c0_95 = arith.constant 0 : index
    %c0_96 = arith.constant 0 : index
    %92 = vector.load %arg10[%c0_95, %c0_96] : memref<16x512xbf16, #tpu.memory_space<vmem>>, vector<16x384xbf16>
    %c0_97 = arith.constant 0 : index
    %c0_98 = arith.constant 0 : index
    %93 = vector.load %arg8[%c0_97, %c0_98] : memref<144x384xbf16, #tpu.memory_space<vmem>>, vector<16x384xbf16>
    tpu.vector_store %arg8[%c0_97, %c0_98], %92 {strides = array<i32>} : memref<144x384xbf16, #tpu.memory_space<vmem>>, vector<16x384xbf16>,
    %c0_99 = arith.constant 0 : index
    %c1_100 = arith.constant 1 : index
    %94 = vector.load %arg10[%c0_99, %c1_100] : memref<16x512xbf16, #tpu.memory_space<vmem>>, vector<16x384xbf16>
    %c16_101 = arith.constant 16 : index
    %c0_102 = arith.constant 0 : index
    %95 = vector.load %arg8[%c16_101, %c0_102] : memref<144x384xbf16, #tpu.memory_space<vmem>>, vector<16x384xbf16>
    tpu.vector_store %arg8[%c16_101, %c0_102], %94 {strides = array<i32>} : memref<144x384xbf16, #tpu.memory_space<vmem>>, vector<16x384xbf16>,
    %c0_103 = arith.constant 0 : index
    %c2_104 = arith.constant 2 : index
    %96 = vector.load %arg10[%c0_103, %c2_104] : memref<16x512xbf16, #tpu.memory_space<vmem>>, vector<16x384xbf16>
    %c32_105 = arith.constant 32 : index
    %c0_106 = arith.constant 0 : index
    %97 = vector.load %arg8[%c32_105, %c0_106] : memref<144x384xbf16, #tpu.memory_space<vmem>>, vector<16x384xbf16>
    tpu.vector_store %arg8[%c32_105, %c0_106], %96 {strides = array<i32>} : memref<144x384xbf16, #tpu.memory_space<vmem>>, vector<16x384xbf16>,
    %c0_107 = arith.constant 0 : index
    %c18_108 = arith.constant 18 : index
    %98 = vector.load %arg10[%c0_107, %c18_108] : memref<16x512xbf16, #tpu.memory_space<vmem>>, vector<16x384xbf16>
    %c48_109 = arith.constant 48 : index
    %c0_110 = arith.constant 0 : index
    %99 = vector.load %arg8[%c48_109, %c0_110] : memref<144x384xbf16, #tpu.memory_space<vmem>>, vector<16x384xbf16>
    tpu.vector_store %arg8[%c48_109, %c0_110], %98 {strides = array<i32>} : memref<144x384xbf16, #tpu.memory_space<vmem>>, vector<16x384xbf16>,
    %c0_111 = arith.constant 0 : index
    %c19_112 = arith.constant 19 : index
    %100 = vector.load %arg10[%c0_111, %c19_112] : memref<16x512xbf16, #tpu.memory_space<vmem>>, vector<16x384xbf16>
    %c64_113 = arith.constant 64 : index
    %c0_114 = arith.constant 0 : index
    %101 = vector.load %arg8[%c64_113, %c0_114] : memref<144x384xbf16, #tpu.memory_space<vmem>>, vector<16x384xbf16>
    tpu.vector_store %arg8[%c64_113, %c0_114], %100 {strides = array<i32>} : memref<144x384xbf16, #tpu.memory_space<vmem>>, vector<16x384xbf16>,
    %c0_115 = arith.constant 0 : index
    %c20_116 = arith.constant 20 : index
    %102 = vector.load %arg10[%c0_115, %c20_116] : memref<16x512xbf16, #tpu.memory_space<vmem>>, vector<16x384xbf16>
    %c80_117 = arith.constant 80 : index
    %c0_118 = arith.constant 0 : index
    %103 = vector.load %arg8[%c80_117, %c0_118] : memref<144x384xbf16, #tpu.memory_space<vmem>>, vector<16x384xbf16>
    tpu.vector_store %arg8[%c80_117, %c0_118], %102 {strides = array<i32>} : memref<144x384xbf16, #tpu.memory_space<vmem>>, vector<16x384xbf16>,
    %c0_119 = arith.constant 0 : index
    %c36_120 = arith.constant 36 : index
    %104 = vector.load %arg10[%c0_119, %c36_120] : memref<16x512xbf16, #tpu.memory_space<vmem>>, vector<16x384xbf16>
    %c96_121 = arith.constant 96 : index
    %c0_122 = arith.constant 0 : index
    %105 = vector.load %arg8[%c96_121, %c0_122] : memref<144x384xbf16, #tpu.memory_space<vmem>>, vector<16x384xbf16>
    tpu.vector_store %arg8[%c96_121, %c0_122], %104 {strides = array<i32>} : memref<144x384xbf16, #tpu.memory_space<vmem>>, vector<16x384xbf16>,
    %c0_123 = arith.constant 0 : index
    %c37_124 = arith.constant 37 : index
    %106 = vector.load %arg10[%c0_123, %c37_124] : memref<16x512xbf16, #tpu.memory_space<vmem>>, vector<16x384xbf16>
    %c112_125 = arith.constant 112 : index
    %c0_126 = arith.constant 0 : index
    %107 = vector.load %arg8[%c112_125, %c0_126] : memref<144x384xbf16, #tpu.memory_space<vmem>>, vector<16x384xbf16>
    tpu.vector_store %arg8[%c112_125, %c0_126], %106 {strides = array<i32>} : memref<144x384xbf16, #tpu.memory_space<vmem>>, vector<16x384xbf16>,
    %c0_127 = arith.constant 0 : index
    %c38_128 = arith.constant 38 : index
    %108 = vector.load %arg10[%c0_127, %c38_128] : memref<16x512xbf16, #tpu.memory_space<vmem>>, vector<16x384xbf16>
    %c128_129 = arith.constant 128 : index
    %c0_130 = arith.constant 0 : index
    %109 = vector.load %arg8[%c128_129, %c0_130] : memref<144x384xbf16, #tpu.memory_space<vmem>>, vector<16x384xbf16>
    tpu.vector_store %arg8[%c128_129, %c0_130], %108 {strides = array<i32>} : memref<144x384xbf16, #tpu.memory_space<vmem>>, vector<16x384xbf16>,
    %c0_131 = arith.constant 0 : index
    %c0_132 = arith.constant 0 : index
    %110 = vector.load %arg4[%c0_131, %c0_132] : memref<16x144xbf16, #tpu.memory_space<vmem>>, vector<16x144xbf16>
    %c0_133 = arith.constant 0 : index
    %c0_134 = arith.constant 0 : index
    %111 = vector.load %arg8[%c0_133, %c0_134] : memref<144x384xbf16, #tpu.memory_space<vmem>>, vector<144x384xbf16>
    %cst_135 = arith.constant dense<0.000000e+00> : vector<16x384xf32>
    %112 = tpu.matmul %110, %111, %cst_135 {dimension_numbers = #tpu.dot_dimension_numbers<[1], [0], [0], [1], [0, 0, 1, 1], [], []>} : vector<16x144xbf16>, vector<144x384xbf16>, vector<16x384xf32> -> vector<16x384xf32>
    %c0_136 = arith.constant 0 : index
    %c19_137 = arith.constant 19 : index
    %113 = vector.load %arg9[%c0_136, %c19_137] : memref<16x512xf32, #tpu.memory_space<vmem>>, vector<16x384xf32>
    %c0_138 = arith.constant 0 : index
    %c0_139 = arith.constant 0 : index
    %114 = vector.load %arg5[%c0_138, %c0_139] : memref<16x1xf32, #tpu.memory_space<vmem>>, vector<16x1xf32>
    %115 = vector.broadcast %114 : vector<16x1xf32> to vector<16x384xf32>
    %116 = arith.addf %112, %115 : vector<16x384xf32>
    %117 = arith.addf %116, %113 : vector<16x384xf32>
    %cst_140 = arith.constant 0.000000e+00 : f32
    %118 = vector.broadcast %cst_140 : f32 to vector<16x384xf32>
    %119 = arith.maximumf %117, %118 : vector<16x384xf32>
    %c0_141 = arith.constant 0 : index
    %c0_142 = arith.constant 0 : index
    %c0_143 = arith.constant 0 : index
    %120 = vector.load %arg7[%c0_141, %c0_142, %c0_143] : memref<1x16x384xf32, #tpu.memory_space<vmem>>, vector<1x16x384xf32>
    %121 = vector.shape_cast %120 : vector<1x16x384xf32> to vector<16x384xf32>
    %122 = vector.shape_cast %119 : vector<16x384xf32> to vector<1x16x384xf32>
    tpu.vector_store %arg7[%c0_141, %c0_142, %c0_143], %122 {strides = array<i32>} : memref<1x16x384xf32, #tpu.memory_space<vmem>>, vector<1x16x384xf32>,
    return
  }
  func.func @transform_0(%arg0: i32) -> (i32, i32, i32) {
    %c0_i32 = arith.constant 0 : i32
    %c0_i32_0 = arith.constant 0 : i32
    %c0_i32_1 = arith.constant 0 : i32
    return %arg0, %c0_i32, %c0_i32_0 : i32, i32, i32
  }
  func.func @transform_1(%arg0: i32) -> (i32, i32) {
    %c0_i32 = arith.constant 0 : i32
    %c0_i32_0 = arith.constant 0 : i32
    %c0_i32_1 = arith.constant 0 : i32
    return %c0_i32, %c0_i32_0 : i32, i32
  }
  func.func @transform_2(%arg0: i32) -> (i32, i32) {
    %c0_i32 = arith.constant 0 : i32
    %c0_i32_0 = arith.constant 0 : i32
    %c0_i32_1 = arith.constant 0 : i32
    return %c0_i32, %c0_i32_0 : i32, i32
  }
  func.func @transform_3(%arg0: i32) -> (i32, i32) {
    %c0_i32 = arith.constant 0 : i32
    %c0_i32_0 = arith.constant 0 : i32
    %c0_i32_1 = arith.constant 0 : i32
    return %c0_i32, %c0_i32_0 : i32, i32
  }
  func.func @transform_4(%arg0: i32) -> (i32, i32) {
    %c0_i32 = arith.constant 0 : i32
    %c0_i32_0 = arith.constant 0 : i32
    %c0_i32_1 = arith.constant 0 : i32
    return %c0_i32, %c0_i32_0 : i32, i32
  }
  func.func @transform_5(%arg0: i32) -> (i32, i32) {
    %c0_i32 = arith.constant 0 : i32
    %c0_i32_0 = arith.constant 0 : i32
    %c0_i32_1 = arith.constant 0 : i32
    return %c0_i32, %c0_i32_0 : i32, i32
  }
  func.func @transform_6(%arg0: i32) -> (i32, i32, i32) {
    %c0_i32 = arith.constant 0 : i32
    %c0_i32_0 = arith.constant 0 : i32
    %c0_i32_1 = arith.constant 0 : i32
    return %arg0, %c0_i32, %c0_i32_0 : i32, i32, i32
  }
}

</mosaic_0001>

<llo_original>
// kernel: tpu_custom_call.1
$region0: #{tpu_custom_call.1}
  #allocation0 [shape = 'u32[]', space=smem, size = 0x4, offset = 0x4, fixed_abs, tag = 'smem constant byte address 0x4 - core index']
  #allocation1 [shape = 'u32[144,128]{1,0:T(1,128)}', space=vmem, size = 0x12000, scoped, tag = 'internal scratch']
  #allocation2 [shape = 'bf16[144,384]{1,0:T(16,128)(2,1)}', space=vmem, size = 0x1b000, scoped, tag = 'scratch operand']
  #allocation3 [shape = 'f32[16,512]{1,0:T(8,128)}', space=vmem, size = 0x8000, scoped, tag = 'scratch operand']
  #allocation4 [shape = 'bf16[16,512]{1,0:T(16,128)(2,1)}', space=vmem, size = 0x4000, scoped, tag = 'scratch operand']
  %s0 = inlined_call_operand.vmem [shape: f32[2,4,256], index: 0, kind: input, shape index: {}]
  %s1 = inlined_call_operand.vmem [shape: bf16[16,144], index: 1, kind: input, shape index: {}]
  %s2 = inlined_call_operand.vmem [shape: f32[16,1], index: 2, kind: input, shape index: {}]
  %s3 = inlined_call_operand.hbm [shape: bf16[16,144], index: 3, kind: input, shape index: {}]
  %s4 = inlined_call_operand.vmem [shape: f32[16,1], index: 4, kind: input, shape index: {}]
  %s5 = inlined_call_operand.vmem [shape: f32[1,384], index: 5, kind: input, shape index: {}]
  %s6 = inlined_call_operand.hbm [shape: f32[2,16,384], index: 6, kind: output, shape index: {}]
  %s7 = sld [smem:[#allocation0]]
  $region61: #{tpu_custom_call.1} parent=0
    _
  %s9 = ssub.s32 1, %s7
  %s10 = scalar_select 0, %s9, %s7
  $region1: #{tpu_custom_call.1} parent=0
    #allocation5 [shape = 'u8[8192]{0}', space=vmem, size = 0x2000, scoped, tag = 'input window, operand 3, single buffered']
    #allocation6 [shape = 's32[2]{0}', space=sflag, size = 0x8, scoped, tag = 'scoped memory for tpu_custom_call.1']
    #allocation7 [shape = 's32[2]{0}', space=sflag, size = 0x8, scoped, tag = 'scoped memory for tpu_custom_call.1']
    #allocation8 [shape = 'u8[49152]{0}', space=vmem, size = 0xc000, scoped, tag = 'output window, operand 0']
    %11 = vsyncpa [#allocation6], 0
    %12 = vsyncpa [#allocation7], 0
    %s13 = scalar_lea.sflag [#allocation7], 1
    %14 = vsyncpa %s13, 0
    loop: start=0, step=1, limit=4
    $region2: #{tpu_custom_call.1} parent=1 // loop_pre_header
      _
    $region3: #{tpu_custom_call.1} parent=1 // loop_header
      %s16 = sphi 0, %s20
      %p17 = scmp.ge.s32.totalorder %s16, 4
      %s26 = sphi 0, %s28
      %s29 = sphi 0, %s26
      %s30 = sphi 0, %s29
      %s46 = sphi 0, %s30
      %s50 = sphi 0, %s50
      %s52 = sphi 0, %s50
      %s53 = sphi 0, %s52
      %s67 = sphi 0, %s53
      %s71 = sphi 0, %s71
      %s73 = sphi 0, %s71
      %s74 = sphi 0, %s73
      %s88 = sphi 0, %s74
      %s92 = sphi 0, %s92
      %s94 = sphi 0, %s92
      %s95 = sphi 0, %s94
      %s109 = sphi 0, %s95
      %s113 = sphi 0, %s113
      %s115 = sphi 0, %s113
      %s116 = sphi 0, %s115
      %s130 = sphi 0, %s116
      %s134 = sphi 0, %s134
      %s136 = sphi 0, %s134
      %s137 = sphi 0, %s136
      %s151 = sphi 0, %s137
      %s157 = sphi 0, %s159
      %s160 = sphi 0, %s157
      %s161 = sphi 0, %s160
      %s177 = sphi 0, %s161
    $region4: #{tpu_custom_call.1} parent=1 // loop_header_branch
      %19 = sbr.rel (%p17) target = $region8
    $region5: #{tpu_custom_call.1} parent=1 // loop_body
      %s21 = ssub.s32 %s16, 1
      %s22 = ssub.s32 %s16, 2
      %s23 = sadd.s32 %s16, 1
      %s24 = ssub.s32 %s16, %s23
      %p25 = scmp.eq.s32.totalorder %s24, 0
      %s27 = sadd.s32 %s26, 1
      %s28 = scalar_select %p25, %s26, %s27
      %p31 = pneg %p25
      %p32 = scmp.eq.s32.totalorder %s16, 1
      %p33 = por %p31, %p32
      %p34 = scmp.ne.s32.totalorder %s26, %s29
      %p35 = scmp.eq.s32.totalorder %s16, 0
      %p36 = por %p34, %p35
      %p37 = scmp.ne.s32.totalorder %s26, %s29
      %p38 = scmp.eq.s32.totalorder %s21, 1
      %p39 = por %p37, %p38
      %p40 = scmp.ne.s32.totalorder %s29, %s30
      %p41 = scmp.eq.s32.totalorder %s21, 0
      %p42 = por %p40, %p41
      %p43 = scmp.ne.s32.totalorder %s29, %s30
      %p44 = scmp.eq.s32.totalorder %s22, 1
      %p45 = por %p43, %p44
      %p47 = scmp.ne.s32.totalorder %s30, %s46
      %p48 = scmp.eq.s32.totalorder %s22, 0
      %p49 = por %p47, %p48
      %s51 = sadd.s32 %s50, 1
      %p54 = scmp.eq.s32.totalorder %s16, 1
      %p55 = scmp.ne.s32.totalorder %s50, %s52
      %p56 = scmp.eq.s32.totalorder %s16, 0
      %p57 = por %p55, %p56
      %p58 = scmp.ne.s32.totalorder %s50, %s52
      %p59 = scmp.eq.s32.totalorder %s21, 1
      %p60 = por %p58, %p59
      %p61 = scmp.ne.s32.totalorder %s52, %s53
      %p62 = scmp.eq.s32.totalorder %s21, 0
      %p63 = por %p61, %p62
      %p64 = scmp.ne.s32.totalorder %s52, %s53
      %p65 = scmp.eq.s32.totalorder %s22, 1
      %p66 = por %p64, %p65
      %p68 = scmp.ne.s32.totalorder %s53, %s67
      %p69 = scmp.eq.s32.totalorder %s22, 0
      %p70 = por %p68, %p69
      %s72 = sadd.s32 %s71, 1
      %p75 = scmp.eq.s32.totalorder %s16, 1
      %p76 = scmp.ne.s32.totalorder %s71, %s73
      %p77 = scmp.eq.s32.totalorder %s16, 0
      %p78 = por %p76, %p77
      %p79 = scmp.ne.s32.totalorder %s71, %s73
      %p80 = scmp.eq.s32.totalorder %s21, 1
      %p81 = por %p79, %p80
      %p82 = scmp.ne.s32.totalorder %s73, %s74
      %p83 = scmp.eq.s32.totalorder %s21, 0
      %p84 = por %p82, %p83
      %p85 = scmp.ne.s32.totalorder %s73, %s74
      %p86 = scmp.eq.s32.totalorder %s22, 1
      %p87 = por %p85, %p86
      %p89 = scmp.ne.s32.totalorder %s74, %s88
      %p90 = scmp.eq.s32.totalorder %s22, 0
      %p91 = por %p89, %p90
      %s93 = sadd.s32 %s92, 1
      %p96 = scmp.eq.s32.totalorder %s16, 1
      %p97 = scmp.ne.s32.totalorder %s92, %s94
      %p98 = scmp.eq.s32.totalorder %s16, 0
      %p99 = por %p97, %p98
      %p100 = scmp.ne.s32.totalorder %s92, %s94
      %p101 = scmp.eq.s32.totalorder %s21, 1
      %p102 = por %p100, %p101
      %p103 = scmp.ne.s32.totalorder %s94, %s95
      %p104 = scmp.eq.s32.totalorder %s21, 0
      %p105 = por %p103, %p104
      %p106 = scmp.ne.s32.totalorder %s94, %s95
      %p107 = scmp.eq.s32.totalorder %s22, 1
      %p108 = por %p106, %p107
      %p110 = scmp.ne.s32.totalorder %s95, %s109
      %p111 = scmp.eq.s32.totalorder %s22, 0
      %p112 = por %p110, %p111
      %s114 = sadd.s32 %s113, 1
      %p117 = scmp.eq.s32.totalorder %s16, 1
      %p118 = scmp.ne.s32.totalorder %s113, %s115
      %p119 = scmp.eq.s32.totalorder %s16, 0
      %p120 = por %p118, %p119
      %p121 = scmp.ne.s32.totalorder %s113, %s115
      %p122 = scmp.eq.s32.totalorder %s21, 1
      %p123 = por %p121, %p122
      %p124 = scmp.ne.s32.totalorder %s115, %s116
      %p125 = scmp.eq.s32.totalorder %s21, 0
      %p126 = por %p124, %p125
      %p127 = scmp.ne.s32.totalorder %s115, %s116
      %p128 = scmp.eq.s32.totalorder %s22, 1
      %p129 = por %p127, %p128
      %p131 = scmp.ne.s32.totalorder %s116, %s130
      %p132 = scmp.eq.s32.totalorder %s22, 0
      %p133 = por %p131, %p132
      %s135 = sadd.s32 %s134, 1
      %p138 = scmp.eq.s32.totalorder %s16, 1
      %p139 = scmp.ne.s32.totalorder %s134, %s136
      %p140 = scmp.eq.s32.totalorder %s16, 0
      %p141 = por %p139, %p140
      %p142 = scmp.ne.s32.totalorder %s134, %s136
      %p143 = scmp.eq.s32.totalorder %s21, 1
      %p144 = por %p142, %p143
      %p145 = scmp.ne.s32.totalorder %s136, %s137
      %p146 = scmp.eq.s32.totalorder %s21, 0
      %p147 = por %p145, %p146
      %p148 = scmp.ne.s32.totalorder %s136, %s137
      %p149 = scmp.eq.s32.totalorder %s22, 1
      %p150 = por %p148, %p149
      %p152 = scmp.ne.s32.totalorder %s137, %s151
      %p153 = scmp.eq.s32.totalorder %s22, 0
      %p154 = por %p152, %p153
      %s155 = ssub.s32 %s16, %s23
      %p156 = scmp.eq.s32.totalorder %s155, 0
      %s158 = sadd.s32 %s157, 1
      %s159 = scalar_select %p156, %s157, %s158
      %p162 = pneg %p156
      %p163 = scmp.eq.s32.totalorder %s16, 1
      %p164 = por %p162, %p163
      %p165 = scmp.ne.s32.totalorder %s157, %s160
      %p166 = scmp.eq.s32.totalorder %s16, 0
      %p167 = por %p165, %p166
      %p168 = scmp.ne.s32.totalorder %s157, %s160
      %p169 = scmp.eq.s32.totalorder %s21, 1
      %p170 = por %p168, %p169
      %p171 = scmp.ne.s32.totalorder %s160, %s161
      %p172 = scmp.eq.s32.totalorder %s21, 0
      %p173 = por %p171, %p172
      %p174 = scmp.ne.s32.totalorder %s160, %s161
      %p175 = scmp.eq.s32.totalorder %s22, 1
      %p176 = por %p174, %p175
      %p178 = scmp.ne.s32.totalorder %s161, %s177
      %p179 = scmp.eq.s32.totalorder %s22, 0
      %p180 = por %p178, %p179
      %p181 = scmp.le.s32.totalorder 1, %s16
      %p182 = scmp.lt.s32.totalorder %s16, 3
      %p183 = pnand %p181, %p182
      %p184 = pneg %p183
      // Predicated region
      $region9: #{tpu_custom_call.1} parent=5 // pred_check
        _
      $region10: #{tpu_custom_call.1} parent=5 // pred_check_branch
        %186 = sbr.rel (%p183) target = $region12
      $region11: #{tpu_custom_call.1} parent=5 // pred_region
        %s187 = ssub.s32 %s16, 1
        // Predicated region
        $region13: #{tpu_custom_call.1} parent=11 // pred_check
          %p188 = pneg %p63
        $region14: #{tpu_custom_call.1} parent=11 // pred_check_branch
          %190 = sbr.rel (%p188) target = $region16
        $region15: #{tpu_custom_call.1} parent=11 // pred_region
          _
        $region16: #{tpu_custom_call.1} parent=11 // pred_fallthru
          _
        // Predicated region
        $region17: #{tpu_custom_call.1} parent=11 // pred_check
          %p191 = pneg %p84
        $region18: #{tpu_custom_call.1} parent=11 // pred_check_branch
          %193 = sbr.rel (%p191) target = $region20
        $region19: #{tpu_custom_call.1} parent=11 // pred_region
          _
        $region20: #{tpu_custom_call.1} parent=11 // pred_fallthru
          _
        // Predicated region
        $region21: #{tpu_custom_call.1} parent=11 // pred_check
          %p194 = pneg %p105
        $region22: #{tpu_custom_call.1} parent=11 // pred_check_branch
          %196 = sbr.rel (%p194) target = $region24
        $region23: #{tpu_custom_call.1} parent=11 // pred_region
          %s198 = ssub.s32 256, 256
          %199 = vsyncadd [#allocation6], %s198
          %s200 = sshll.u32 [#allocation5], 4
          %s201 = int_to_ptr.vmem [resolvable:$true] %s200
          %206 = dma.hbm_to_vmem [thread:$0]  %s3, 256, %s201, [#allocation6], 128, 128, 8
        $region24: #{tpu_custom_call.1} parent=11 // pred_fallthru
          _
        // Predicated region
        $region25: #{tpu_custom_call.1} parent=11 // pred_check
          %p207 = pneg %p126
        $region26: #{tpu_custom_call.1} parent=11 // pred_check_branch
          %209 = sbr.rel (%p207) target = $region28
        $region27: #{tpu_custom_call.1} parent=11 // pred_region
          _
        $region28: #{tpu_custom_call.1} parent=11 // pred_fallthru
          _
        // Predicated region
        $region29: #{tpu_custom_call.1} parent=11 // pred_check
          %p210 = pneg %p147
        $region30: #{tpu_custom_call.1} parent=11 // pred_check_branch
          %212 = sbr.rel (%p210) target = $region32
        $region31: #{tpu_custom_call.1} parent=11 // pred_region
          _
        $region32: #{tpu_custom_call.1} parent=11 // pred_fallthru
          _
      $region12: #{tpu_custom_call.1} parent=5 // pred_fallthru
        _
      %p213 = scmp.lt.s32.totalorder %s16, 2
      // Predicated region
      $region33: #{tpu_custom_call.1} parent=5 // pred_check
        %p214 = pneg %p213
      $region34: #{tpu_custom_call.1} parent=5 // pred_check_branch
        %216 = sbr.rel (%p214) target = $region36
      $region35: #{tpu_custom_call.1} parent=5 // pred_region
        // Predicated region
        $region37: #{tpu_custom_call.1} parent=35 // pred_check
          %p217 = pneg %p36
        $region38: #{tpu_custom_call.1} parent=35 // pred_check_branch
          %219 = sbr.rel (%p217) target = $region40
        $region39: #{tpu_custom_call.1} parent=35 // pred_region
          %p220 = scmp.lt.s32.totalorder %s16, 1
          %s221 = scalar_select %p220, %s16, 1
          %s222 = smul.addr %s221, 2
          %s223 = smul.addr %s222, 4
          %s224 = scalar_lea.vmem %s0, %s223
        $region40: #{tpu_custom_call.1} parent=35 // pred_fallthru
          _
      $region36: #{tpu_custom_call.1} parent=5 // pred_fallthru
        _
      %p225 = scmp.le.s32.totalorder 1, %s16
      %p226 = scmp.lt.s32.totalorder %s16, 3
      %p227 = pnand %p225, %p226
      %p228 = pneg %p227
      // Predicated region
      $region41: #{tpu_custom_call.1} parent=5 // pred_check
        _
      $region42: #{tpu_custom_call.1} parent=5 // pred_check_branch
        %230 = sbr.rel (%p227) target = $region44
      $region43: #{tpu_custom_call.1} parent=5 // pred_region
        %s231 = ssub.s32 %s16, 1
        // Predicated region
        $region45: #{tpu_custom_call.1} parent=43 // pred_check
          %p232 = pneg %p105
        $region46: #{tpu_custom_call.1} parent=43 // pred_check_branch
          %234 = sbr.rel (%p232) target = $region48
        $region47: #{tpu_custom_call.1} parent=43 // pred_region
          %235 = dma.done [#allocation6], 256
        $region48: #{tpu_custom_call.1} parent=43 // pred_fallthru
          _
        %p236 = scmp.lt.s32.totalorder %s21, 1
        %s237 = scalar_select %p236, %s21, 1
        %s238 = smul.addr %s237, 2
        %s239 = smul.addr %s238, 4
        %s240 = scalar_lea.vmem %s0, %s239
        %p241 = pneg %p42
        %p242 = pneg %p39
        %p243 = pneg %p63
        %p244 = pneg %p60
        %p245 = pneg %p84
        %p246 = pneg %p81
        %p247 = pneg %p105
        %p248 = pneg %p102
        %p249 = pneg %p126
        %p250 = pneg %p123
        %p251 = pneg %p147
        %p252 = pneg %p144
        %p253 = pneg %p173
        %p254 = pneg %p170
        %s255 = sand.u32 %s160, 1
        %s256 = scalar_lea.sflag [#allocation7], %s255
        %s257 = sand.u32 %s160, 1
        %s258 = smul.addr %s257, 48
        %s259 = scalar_lea.vmem [#allocation8], %s258
        %p260 = scmp.lt.s32.totalorder %s21, 1
        %s261 = scalar_select %p260, %s21, 1
        %s262 = smul.addr %s261, 2
        %s263 = smul.addr %s262, 4
        %s264 = scalar_lea.vmem %s0, %s263
        %266 = vst [vmem:[#allocation3] sm:$0xff] 0.0
        %267 = vst [vmem:[#allocation3 + $0x8] sm:$0xff] 0.0
        %268 = vst [vmem:[#allocation3 + $0x10] sm:$0xff] 0.0
        %269 = vst [vmem:[#allocation3 + $0x18] sm:$0xff] 0.0
        %270 = vst [vmem:[#allocation3 + $0x20] sm:$0xff] 0.0
        %271 = vst [vmem:[#allocation3 + $0x28] sm:$0xff] 0.0
        %272 = vst [vmem:[#allocation3 + $0x30] sm:$0xff] 0.0
        %273 = vst [vmem:[#allocation3 + $0x38] sm:$0xff] 0.0
        %274 = vst [vmem:[#allocation4] sm:$0xff] 0
        %275 = vst [vmem:[#allocation4 + $0x8] sm:$0xff] 0
        %276 = vst [vmem:[#allocation4 + $0x10] sm:$0xff] 0
        %277 = vst [vmem:[#allocation4 + $0x18] sm:$0xff] 0
        %v278 = vld [vmem:[%s264] sm:$0xf]
        %280 = vrot.lane.b32.xlu0 %v278, 19
        %v281 = vpop.permute.xlu0 %280
        %vm283 = vcmask 281752
        %284 = vst.msk [vmem:[#allocation3] sm:$0xf] %vm283, %v281
        %v285 = vld [vmem:[%s264] sm:$0xf]
        %287 = vrot.lane.b32.xlu0 %v285, 21
        %v288 = vpop.permute.xlu0 %287
        %vm290 = vcmask 429352
        %291 = vst.msk [vmem:[#allocation3] sm:$0xf] %vm290, %v288
        %v292 = vld [vmem:[%s264] sm:$0xf]
        %294 = vrot.lane.b32.xlu0 %v292, 23
        %v295 = vpop.permute.xlu0 %294
        %vm297 = vcmask 576952
        %298 = vst.msk [vmem:[#allocation3] sm:$0xf] %vm297, %v295
        %v299 = vld [vmem:[%s264] sm:$0xf]
        %301 = vrot.lane.b32.xlu0 %v299, 25
        %v302 = vpop.permute.xlu0 %301
        %vm304 = vcmask 724552
        %305 = vst.msk [vmem:[#allocation3] sm:$0xf] %vm304, %v302
        %v306 = vld [vmem:[%s264] sm:$0xf]
        %308 = vrot.lane.b32.xlu0 %v306, 27
        %v309 = vpop.permute.xlu0 %308
        %vm311 = vcmask 872152
        %312 = vst.msk [vmem:[#allocation3] sm:$0xf] %vm311, %v309
        %v313 = vld [vmem:[%s264] sm:$0xf]
        %315 = vrot.lane.b32.xlu0 %v313, 29
        %v316 = vpop.permute.xlu0 %315
        %vm318 = vcmask 1019752
        %319 = vst.msk [vmem:[#allocation3] sm:$0xf] %vm318, %v316
        %v320 = vld [vmem:[%s264] sm:$0xf]
        %322 = vrot.lane.b32.xlu0 %v320, 31
        %v323 = vpop.permute.xlu0 %322
        %vm325 = vcmask 1044472
        %326 = vst.msk [vmem:[#allocation3] sm:$0xf] %vm325, %v323
        %vm327 = vcmask 117760
        %328 = vst.msk [vmem:[#allocation3 + $0x8] sm:$0xf] %vm327, %v323
        %v329 = vld [vmem:[%s264] sm:$0xf]
        %331 = vrot.lane.b32.xlu0 %v329, 33
        %v332 = vpop.permute.xlu0 %331
        %vm334 = vcmask 265352
        %335 = vst.msk [vmem:[#allocation3 + $0x8] sm:$0xf] %vm334, %v332
        %v336 = vld [vmem:[%s264 + $0x4] sm:$0xf]
        %338 = vrot.lane.b32.xlu0 %v336, 35
        %v339 = vpop.permute.xlu0 %338
        %vm341 = vcmask 412952
        %342 = vst.msk [vmem:[#allocation3 + $0x8] sm:$0xf] %vm341, %v339
        %v343 = vld [vmem:[%s264 + $0x4] sm:$0xf]
        %345 = vrot.lane.b32.xlu0 %v343, 37
        %v346 = vpop.permute.xlu0 %345
        %vm348 = vcmask 560552
        %349 = vst.msk [vmem:[#allocation3 + $0x8] sm:$0xf] %vm348, %v346
        %v350 = vld [vmem:[%s264 + $0x4] sm:$0xf]
        %352 = vrot.lane.b32.xlu0 %v350, 39
        %v353 = vpop.permute.xlu0 %352
        %vm355 = vcmask 708152
        %356 = vst.msk [vmem:[#allocation3 + $0x8] sm:$0xf] %vm355, %v353
        %v357 = vld [vmem:[%s264 + $0x4] sm:$0xf]
        %359 = vrot.lane.b32.xlu0 %v357, 41
        %v360 = vpop.permute.xlu0 %359
        %vm362 = vcmask 855752
        %363 = vst.msk [vmem:[#allocation3 + $0x8] sm:$0xf] %vm362, %v360
        %v364 = vld [vmem:[%s264 + $0x4] sm:$0xf]
        %366 = vrot.lane.b32.xlu0 %v364, 43
        %v367 = vpop.permute.xlu0 %366
        %vm369 = vcmask 1003352
        %370 = vst.msk [vmem:[#allocation3 + $0x8] sm:$0xf] %vm369, %v367
        %v371 = vld [vmem:[%s264 + $0x4] sm:$0xf]
        %373 = vrot.lane.b32.xlu0 %v371, 45
        %v374 = vpop.permute.xlu0 %373
        %vm376 = vcmask 1044456
        %377 = vst.msk [vmem:[#allocation3 + $0x8] sm:$0xf] %vm376, %v374
        %vm378 = vcmask 101376
        %379 = vst.msk [vmem:[#allocation3 + $0x10] sm:$0xf] %vm378, %v374
        %v380 = vld [vmem:[%s264 + $0x4] sm:$0xf]
        %382 = vrot.lane.b32.xlu0 %v380, 47
        %v383 = vpop.permute.xlu0 %382
        %vm385 = vcmask 248952
        %386 = vst.msk [vmem:[#allocation3 + $0x10] sm:$0xf] %vm385, %v383
        %v387 = vld [vmem:[%s264 + $0x4] sm:$0xf]
        %389 = vrot.lane.b32.xlu0 %v387, 49
        %v390 = vpop.permute.xlu0 %389
        %vm392 = vcmask 396552
        %393 = vst.msk [vmem:[#allocation3 + $0x10] sm:$0xf] %vm392, %v390
        %v394 = vld [vmem:[#allocation3] sm:$0xff]
        %v395 = vld [vmem:[#allocation3 + $0x8] sm:$0xff]
        %v396 = vld [vmem:[#allocation3 + $0x10] sm:$0xff]
        %v397 = vld [vmem:[#allocation3 + $0x20] sm:$0xff]
        %v398 = vld [vmem:[#allocation3 + $0x28] sm:$0xff]
        %v399 = vld [vmem:[#allocation3 + $0x30] sm:$0xff]
        %v400 = vpack.c.bf16 %v397, %v394
        %v401 = vpack.c.bf16 %v398, %v395
        %v402 = vpack.c.bf16 %v399, %v396
        %403 = vst [vmem:[#allocation2] sm:$0xff] %v400
        %404 = vst [vmem:[#allocation2 + $0x8] sm:$0xff] %v401
        %405 = vst [vmem:[#allocation2 + $0x10] sm:$0xff] %v402
        %v406 = vld [vmem:[#allocation3] sm:$0xff]
        %v407 = vld [vmem:[#allocation3 + $0x8] sm:$0xff]
        %v408 = vld [vmem:[#allocation3 + $0x10] sm:$0xff]
        %v409 = vld [vmem:[#allocation3 + $0x18] sm:$0xff]
        %v410 = vld [vmem:[#allocation3 + $0x20] sm:$0xff]
        %v411 = vld [vmem:[#allocation3 + $0x28] sm:$0xff]
        %v412 = vld [vmem:[#allocation3 + $0x30] sm:$0xff]
        %v413 = vld [vmem:[#allocation3 + $0x38] sm:$0xff]
        %v414 = vpack.c.bf16 %v410, %v406
        %v415 = vpack.c.bf16 %v411, %v407
        %v416 = vpack.c.bf16 %v412, %v408
        %v417 = vpack.c.bf16 %v413, %v409
        %422 = vrot.lane.b32.xlu0 %v414, 127
        %v423 = vpop.permute.xlu0 %422
        %424 = vrot.lane.b32.xlu0 %v415, 127
        %v425 = vpop.permute.xlu0 %424
        %426 = vrot.lane.b32.xlu0 %v416, 127
        %v427 = vpop.permute.xlu0 %426
        %428 = vrot.lane.b32.xlu0 %v417, 127
        %v429 = vpop.permute.xlu0 %428
        %vm430 = vcmask 1039360
        %v431 = vsel %vm430, %v423, %v425
        %v432 = vsel %vm430, %v425, %v427
        %v433 = vsel %vm430, %v427, %v429
        %437 = vst [vmem:[#allocation2 + $0x18] sm:$0xff] %v431
        %438 = vst [vmem:[#allocation2 + $0x20] sm:$0xff] %v432
        %439 = vst [vmem:[#allocation2 + $0x28] sm:$0xff] %v433
        %v440 = vld [vmem:[#allocation3] sm:$0xff]
        %v441 = vld [vmem:[#allocation3 + $0x8] sm:$0xff]
        %v442 = vld [vmem:[#allocation3 + $0x10] sm:$0xff]
        %v443 = vld [vmem:[#allocation3 + $0x18] sm:$0xff]
        %v444 = vld [vmem:[#allocation3 + $0x20] sm:$0xff]
        %v445 = vld [vmem:[#allocation3 + $0x28] sm:$0xff]
        %v446 = vld [vmem:[#allocation3 + $0x30] sm:$0xff]
        %v447 = vld [vmem:[#allocation3 + $0x38] sm:$0xff]
        %v448 = vpack.c.bf16 %v444, %v440
        %v449 = vpack.c.bf16 %v445, %v441
        %v450 = vpack.c.bf16 %v446, %v442
        %v451 = vpack.c.bf16 %v447, %v443
        %456 = vrot.lane.b32.xlu0 %v448, 126
        %v457 = vpop.permute.xlu0 %456
        %458 = vrot.lane.b32.xlu0 %v449, 126
        %v459 = vpop.permute.xlu0 %458
        %460 = vrot.lane.b32.xlu0 %v450, 126
        %v461 = vpop.permute.xlu0 %460
        %462 = vrot.lane.b32.xlu0 %v451, 126
        %v463 = vpop.permute.xlu0 %462
        %vm464 = vcmask 1031168
        %v465 = vsel %vm464, %v457, %v459
        %v466 = vsel %vm464, %v459, %v461
        %v467 = vsel %vm464, %v461, %v463
        %471 = vst [vmem:[#allocation2 + $0x30] sm:$0xff] %v465
        %472 = vst [vmem:[#allocation2 + $0x38] sm:$0xff] %v466
        %473 = vst [vmem:[#allocation2 + $0x40] sm:$0xff] %v467
        %v474 = vld [vmem:[#allocation3] sm:$0xff]
        %v475 = vld [vmem:[#allocation3 + $0x8] sm:$0xff]
        %v476 = vld [vmem:[#allocation3 + $0x10] sm:$0xff]
        %v477 = vld [vmem:[#allocation3 + $0x18] sm:$0xff]
        %v478 = vld [vmem:[#allocation3 + $0x20] sm:$0xff]
        %v479 = vld [vmem:[#allocation3 + $0x28] sm:$0xff]
        %v480 = vld [vmem:[#allocation3 + $0x30] sm:$0xff]
        %v481 = vld [vmem:[#allocation3 + $0x38] sm:$0xff]
        %v482 = vpack.c.bf16 %v478, %v474
        %v483 = vpack.c.bf16 %v479, %v475
        %v484 = vpack.c.bf16 %v480, %v476
        %v485 = vpack.c.bf16 %v481, %v477
        %490 = vrot.lane.b32.xlu0 %v482, 110
        %v491 = vpop.permute.xlu0 %490
        %492 = vrot.lane.b32.xlu0 %v483, 110
        %v493 = vpop.permute.xlu0 %492
        %494 = vrot.lane.b32.xlu0 %v484, 110
        %v495 = vpop.permute.xlu0 %494
        %496 = vrot.lane.b32.xlu0 %v485, 110
        %v497 = vpop.permute.xlu0 %496
        %vm498 = vcmask 900096
        %v499 = vsel %vm498, %v491, %v493
        %v500 = vsel %vm498, %v493, %v495
        %v501 = vsel %vm498, %v495, %v497
        %505 = vst [vmem:[#allocation2 + $0x48] sm:$0xff] %v499
        %506 = vst [vmem:[#allocation2 + $0x50] sm:$0xff] %v500
        %507 = vst [vmem:[#allocation2 + $0x58] sm:$0xff] %v501
        %v508 = vld [vmem:[#allocation3] sm:$0xff]
        %v509 = vld [vmem:[#allocation3 + $0x8] sm:$0xff]
        %v510 = vld [vmem:[#allocation3 + $0x10] sm:$0xff]
        %v511 = vld [vmem:[#allocation3 + $0x18] sm:$0xff]
        %v512 = vld [vmem:[#allocation3 + $0x20] sm:$0xff]
        %v513 = vld [vmem:[#allocation3 + $0x28] sm:$0xff]
        %v514 = vld [vmem:[#allocation3 + $0x30] sm:$0xff]
        %v515 = vld [vmem:[#allocation3 + $0x38] sm:$0xff]
        %v516 = vpack.c.bf16 %v512, %v508
        %v517 = vpack.c.bf16 %v513, %v509
        %v518 = vpack.c.bf16 %v514, %v510
        %v519 = vpack.c.bf16 %v515, %v511
        %524 = vrot.lane.b32.xlu0 %v516, 109
        %v525 = vpop.permute.xlu0 %524
        %526 = vrot.lane.b32.xlu0 %v517, 109
        %v527 = vpop.permute.xlu0 %526
        %528 = vrot.lane.b32.xlu0 %v518, 109
        %v529 = vpop.permute.xlu0 %528
        %530 = vrot.lane.b32.xlu0 %v519, 109
        %v531 = vpop.permute.xlu0 %530
        %vm532 = vcmask 891904
        %v533 = vsel %vm532, %v525, %v527
        %v534 = vsel %vm532, %v527, %v529
        %v535 = vsel %vm532, %v529, %v531
        %539 = vst [vmem:[#allocation2 + $0x60] sm:$0xff] %v533
        %540 = vst [vmem:[#allocation2 + $0x68] sm:$0xff] %v534
        %541 = vst [vmem:[#allocation2 + $0x70] sm:$0xff] %v535
        %v542 = vld [vmem:[#allocation3] sm:$0xff]
        %v543 = vld [vmem:[#allocation3 + $0x8] sm:$0xff]
        %v544 = vld [vmem:[#allocation3 + $0x10] sm:$0xff]
        %v545 = vld [vmem:[#allocation3 + $0x18] sm:$0xff]
        %v546 = vld [vmem:[#allocation3 + $0x20] sm:$0xff]
        %v547 = vld [vmem:[#allocation3 + $0x28] sm:$0xff]
        %v548 = vld [vmem:[#allocation3 + $0x30] sm:$0xff]
        %v549 = vld [vmem:[#allocation3 + $0x38] sm:$0xff]
        %v550 = vpack.c.bf16 %v546, %v542
        %v551 = vpack.c.bf16 %v547, %v543
        %v552 = vpack.c.bf16 %v548, %v544
        %v553 = vpack.c.bf16 %v549, %v545
        %558 = vrot.lane.b32.xlu0 %v550, 108
        %v559 = vpop.permute.xlu0 %558
        %560 = vrot.lane.b32.xlu0 %v551, 108
        %v561 = vpop.permute.xlu0 %560
        %562 = vrot.lane.b32.xlu0 %v552, 108
        %v563 = vpop.permute.xlu0 %562
        %564 = vrot.lane.b32.xlu0 %v553, 108
        %v565 = vpop.permute.xlu0 %564
        %vm566 = vcmask 883712
        %v567 = vsel %vm566, %v559, %v561
        %v568 = vsel %vm566, %v561, %v563
        %v569 = vsel %vm566, %v563, %v565
        %573 = vst [vmem:[#allocation2 + $0x78] sm:$0xff] %v567
        %574 = vst [vmem:[#allocation2 + $0x80] sm:$0xff] %v568
        %575 = vst [vmem:[#allocation2 + $0x88] sm:$0xff] %v569
        %v576 = vld [vmem:[#allocation3] sm:$0xff]
        %v577 = vld [vmem:[#allocation3 + $0x8] sm:$0xff]
        %v578 = vld [vmem:[#allocation3 + $0x10] sm:$0xff]
        %v579 = vld [vmem:[#allocation3 + $0x18] sm:$0xff]
        %v580 = vld [vmem:[#allocation3 + $0x20] sm:$0xff]
        %v581 = vld [vmem:[#allocation3 + $0x28] sm:$0xff]
        %v582 = vld [vmem:[#allocation3 + $0x30] sm:$0xff]
        %v583 = vld [vmem:[#allocation3 + $0x38] sm:$0xff]
        %v584 = vpack.c.bf16 %v580, %v576
        %v585 = vpack.c.bf16 %v581, %v577
        %v586 = vpack.c.bf16 %v582, %v578
        %v587 = vpack.c.bf16 %v583, %v579
        %592 = vrot.lane.b32.xlu0 %v584, 92
        %v593 = vpop.permute.xlu0 %592
        %594 = vrot.lane.b32.xlu0 %v585, 92
        %v595 = vpop.permute.xlu0 %594
        %596 = vrot.lane.b32.xlu0 %v586, 92
        %v597 = vpop.permute.xlu0 %596
        %598 = vrot.lane.b32.xlu0 %v587, 92
        %v599 = vpop.permute.xlu0 %598
        %vm600 = vcmask 752640
        %v601 = vsel %vm600, %v593, %v595
        %v602 = vsel %vm600, %v595, %v597
        %v603 = vsel %vm600, %v597, %v599
        %607 = vst [vmem:[#allocation2 + $0x90] sm:$0xff] %v601
        %608 = vst [vmem:[#allocation2 + $0x98] sm:$0xff] %v602
        %609 = vst [vmem:[#allocation2 + $0xa0] sm:$0xff] %v603
        %v610 = vld [vmem:[#allocation3] sm:$0xff]
        %v611 = vld [vmem:[#allocation3 + $0x8] sm:$0xff]
        %v612 = vld [vmem:[#allocation3 + $0x10] sm:$0xff]
        %v613 = vld [vmem:[#allocation3 + $0x18] sm:$0xff]
        %v614 = vld [vmem:[#allocation3 + $0x20] sm:$0xff]
        %v615 = vld [vmem:[#allocation3 + $0x28] sm:$0xff]
        %v616 = vld [vmem:[#allocation3 + $0x30] sm:$0xff]
        %v617 = vld [vmem:[#allocation3 + $0x38] sm:$0xff]
        %v618 = vpack.c.bf16 %v614, %v610
        %v619 = vpack.c.bf16 %v615, %v611
        %v620 = vpack.c.bf16 %v616, %v612
        %v621 = vpack.c.bf16 %v617, %v613
        %626 = vrot.lane.b32.xlu0 %v618, 91
        %v627 = vpop.permute.xlu0 %626
        %628 = vrot.lane.b32.xlu0 %v619, 91
        %v629 = vpop.permute.xlu0 %628
        %630 = vrot.lane.b32.xlu0 %v620, 91
        %v631 = vpop.permute.xlu0 %630
        %632 = vrot.lane.b32.xlu0 %v621, 91
        %v633 = vpop.permute.xlu0 %632
        %vm634 = vcmask 744448
        %v635 = vsel %vm634, %v627, %v629
        %v636 = vsel %vm634, %v629, %v631
        %v637 = vsel %vm634, %v631, %v633
        %641 = vst [vmem:[#allocation2 + $0xa8] sm:$0xff] %v635
        %642 = vst [vmem:[#allocation2 + $0xb0] sm:$0xff] %v636
        %643 = vst [vmem:[#allocation2 + $0xb8] sm:$0xff] %v637
        %v644 = vld [vmem:[#allocation3] sm:$0xff]
        %v645 = vld [vmem:[#allocation3 + $0x8] sm:$0xff]
        %v646 = vld [vmem:[#allocation3 + $0x10] sm:$0xff]
        %v647 = vld [vmem:[#allocation3 + $0x18] sm:$0xff]
        %v648 = vld [vmem:[#allocation3 + $0x20] sm:$0xff]
        %v649 = vld [vmem:[#allocation3 + $0x28] sm:$0xff]
        %v650 = vld [vmem:[#allocation3 + $0x30] sm:$0xff]
        %v651 = vld [vmem:[#allocation3 + $0x38] sm:$0xff]
        %v652 = vpack.c.bf16 %v648, %v644
        %v653 = vpack.c.bf16 %v649, %v645
        %v654 = vpack.c.bf16 %v650, %v646
        %v655 = vpack.c.bf16 %v651, %v647
        %660 = vrot.lane.b32.xlu0 %v652, 90
        %v661 = vpop.permute.xlu0 %660
        %662 = vrot.lane.b32.xlu0 %v653, 90
        %v663 = vpop.permute.xlu0 %662
        %664 = vrot.lane.b32.xlu0 %v654, 90
        %v665 = vpop.permute.xlu0 %664
        %666 = vrot.lane.b32.xlu0 %v655, 90
        %v667 = vpop.permute.xlu0 %666
        %vm668 = vcmask 736256
        %v669 = vsel %vm668, %v661, %v663
        %v670 = vsel %vm668, %v663, %v665
        %v671 = vsel %vm668, %v665, %v667
        %675 = vst [vmem:[#allocation2 + $0xc0] sm:$0xff] %v669
        %676 = vst [vmem:[#allocation2 + $0xc8] sm:$0xff] %v670
        %677 = vst [vmem:[#allocation2 + $0xd0] sm:$0xff] %v671
        %v678 = vld [vmem:[%s1] sm:$0xff]
        %v679 = vld [vmem:[%s1 + $0x8] sm:$0xff]
        %v680 = vld [vmem:[#allocation2] sm:$0xff]
        %v681 = vld [vmem:[#allocation2 + $0x8] sm:$0xff]
        %v682 = vld [vmem:[#allocation2 + $0x10] sm:$0xff]
        %v683 = vld [vmem:[#allocation2 + $0x18] sm:$0xff]
        %v684 = vld [vmem:[#allocation2 + $0x20] sm:$0xff]
        %v685 = vld [vmem:[#allocation2 + $0x28] sm:$0xff]
        %v686 = vld [vmem:[#allocation2 + $0x30] sm:$0xff]
        %v687 = vld [vmem:[#allocation2 + $0x38] sm:$0xff]
        %v688 = vld [vmem:[#allocation2 + $0x40] sm:$0xff]
        %v689 = vld [vmem:[#allocation2 + $0x48] sm:$0xff]
        %v690 = vld [vmem:[#allocation2 + $0x50] sm:$0xff]
        %v691 = vld [vmem:[#allocation2 + $0x58] sm:$0xff]
        %v692 = vld [vmem:[#allocation2 + $0x60] sm:$0xff]
        %v693 = vld [vmem:[#allocation2 + $0x68] sm:$0xff]
        %v694 = vld [vmem:[#allocation2 + $0x70] sm:$0xff]
        %v695 = vld [vmem:[#allocation2 + $0x78] sm:$0xff]
        %v696 = vld [vmem:[#allocation2 + $0x80] sm:$0xff]
        %v697 = vld [vmem:[#allocation2 + $0x88] sm:$0xff]
        %v698 = vld [vmem:[#allocation2 + $0x90] sm:$0xff]
        %v699 = vld [vmem:[#allocation2 + $0x98] sm:$0xff]
        %v700 = vld [vmem:[#allocation2 + $0xa0] sm:$0xff]
        %v701 = vld [vmem:[#allocation2 + $0xa8] sm:$0xff]
        %v702 = vld [vmem:[#allocation2 + $0xb0] sm:$0xff]
        %v703 = vld [vmem:[#allocation2 + $0xb8] sm:$0xff]
        %v704 = vld [vmem:[#allocation2 + $0xc0] sm:$0xff]
        %v705 = vld [vmem:[#allocation2 + $0xc8] sm:$0xff]
        %v706 = vld [vmem:[#allocation2 + $0xd0] sm:$0xff]
        %v707 = vld [vmem:[%s2] sm:$0xff]
        %v708 = vld [vmem:[%s2 + $0x8] sm:$0xff]
        %710 = vset.pattern.permute.xlu0 0
        %711 = vperm.xlu0 %710, %v707
        %v712 = vpop.permute.xlu0 %711
        %715 = vset.pattern.permute.xlu0 0
        %716 = vperm.xlu0 %715, %v708
        %v717 = vpop.permute.xlu0 %716
        %v721 = vunpack.c.l.b16 %v678
        %v722 = vunpack.c.h.b16 %v678
        %v723 = vunpack.c.l.b16 %v679
        %v724 = vunpack.c.h.b16 %v679
        %v725 = vpack.c.b16 %v723, %v721
        %v726 = vpack.c.b16 %v724, %v722
        %vm728 = vcmask 130048
        %v730 = vsel %vm728, %v726, 0
        %732 = vmatprep.subr.bf16.mxu0 %v681
        %733 = vmatpush1.bf16.msra.mxu0 %v680
        %734 = vmatprep.subr.bf16.mxu0 %v684
        %735 = vmatpush1.bf16.msra.mxu0 %v683
        %736 = vmatprep.subr.bf16.mxu0 %v687
        %737 = vmatpush1.bf16.msra.mxu0 %v686
        %738 = vmatprep.subr.bf16.mxu0 %v690
        %739 = vmatpush1.bf16.msra.mxu0 %v689
        %740 = vmatprep.subr.bf16.mxu0 %v693
        %741 = vmatpush1.bf16.msra.mxu0 %v692
        %742 = vmatprep.subr.bf16.mxu0 %v696
        %743 = vmatpush1.bf16.msra.mxu0 %v695
        %744 = vmatprep.subr.bf16.mxu0 %v699
        %745 = vmatpush1.bf16.msra.mxu0 %v698
        %746 = vmatprep.subr.bf16.mxu0 %v702
        %747 = vmatpush1.bf16.msra.mxu0 %v701
        %748 = vmatprep.subr.bf16.mxu0 %v705
        %749 = vmatpush1.bf16.msra.mxu0 %v704
        %750 = vmatprep.subr.bf16.mxu0 0
        %751 = vmatpush1.bf16.msra.mxu0 0
        %752 = vmatprep.subr.bf16.mxu0 0
        %753 = vmatpush1.bf16.msra.mxu0 0
        %754 = vmatprep.subr.bf16.mxu0 0
        %755 = vmatpush1.bf16.msra.mxu0 0
        %756 = vmatprep.subr.bf16.mxu0 0
        %757 = vmatpush1.bf16.msra.mxu0 0
        %758 = vmatprep.subr.bf16.mxu0 0
        %759 = vmatpush1.bf16.msra.mxu0 0
        %760 = vmatprep.subr.bf16.mxu0 0
        %761 = vmatpush1.bf16.msra.mxu0 0
        %762 = vmatprep.subr.bf16.mxu0 0
        %763 = vmatpush1.bf16.msra.mxu0 0
        %764 = vmatprep.mubr.bf16.mxu0 %v730
        %765 = vmatmul.mubr.bf16.gmra.mrb[0].mxu0 %v725
        %v766 = vpop.f32.mrb[0].mxu0
        %v767 = vadd.f32 %v712, %v766
        %v768 = vpop.f32.mrb[0].mxu0
        %v769 = vadd.f32 %v712, %v768
        %v770 = vpop.f32.mrb[0].mxu0
        %v771 = vadd.f32 %v717, %v770
        %v772 = vpop.f32.mrb[0].mxu0
        %v773 = vadd.f32 %v717, %v772
        %774 = vdwg.mxu0
        %775 = vmatprep.subr.bf16.mxu0 0
        %776 = vmatpush1.bf16.msra.mxu0 %v682
        %777 = vmatprep.subr.bf16.mxu0 0
        %778 = vmatpush1.bf16.msra.mxu0 %v685
        %779 = vmatprep.subr.bf16.mxu0 0
        %780 = vmatpush1.bf16.msra.mxu0 %v688
        %781 = vmatprep.subr.bf16.mxu0 0
        %782 = vmatpush1.bf16.msra.mxu0 %v691
        %783 = vmatprep.subr.bf16.mxu0 0
        %784 = vmatpush1.bf16.msra.mxu0 %v694
        %785 = vmatprep.subr.bf16.mxu0 0
        %786 = vmatpush1.bf16.msra.mxu0 %v697
        %787 = vmatprep.subr.bf16.mxu0 0
        %788 = vmatpush1.bf16.msra.mxu0 %v700
        %789 = vmatprep.subr.bf16.mxu0 0
        %790 = vmatpush1.bf16.msra.mxu0 %v703
        %791 = vmatprep.subr.bf16.mxu0 0
        %792 = vmatpush1.bf16.msra.mxu0 %v706
        %793 = vmatprep.subr.bf16.mxu0 0
        %794 = vmatpush1.bf16.msra.mxu0 0
        %795 = vmatprep.subr.bf16.mxu0 0
        %796 = vmatpush1.bf16.msra.mxu0 0
        %797 = vmatprep.subr.bf16.mxu0 0
        %798 = vmatpush1.bf16.msra.mxu0 0
        %799 = vmatprep.subr.bf16.mxu0 0
        %800 = vmatpush1.bf16.msra.mxu0 0
        %801 = vmatprep.subr.bf16.mxu0 0
        %802 = vmatpush1.bf16.msra.mxu0 0
        %803 = vmatprep.subr.bf16.mxu0 0
        %804 = vmatpush1.bf16.msra.mxu0 0
        %805 = vmatprep.subr.bf16.mxu0 0
        %806 = vmatpush1.bf16.msra.mxu0 0
        %807 = vmatprep.mubr.bf16.mxu0 %v730
        %808 = vmatmul.mubr.bf16.gmra.mrb[0].mxu0 %v725
        %v809 = vpop.f32.mrb[0].mxu0
        %v810 = vadd.f32 %v712, %v809
        %v811 = vpop.f32.mrb[0].mxu0
        %v812 = vpop.f32.mrb[0].mxu0
        %v813 = vadd.f32 %v717, %v812
        %v814 = vpop.f32.mrb[0].mxu0
        %815 = vdwg.mxu0
        %v816 = vmax.f32 %v767, 0.0
        %v817 = vmax.f32 %v769, 0.0
        %v818 = vmax.f32 %v810, 0.0
        %v819 = vmax.f32 %v771, 0.0
        %v820 = vmax.f32 %v773, 0.0
        %v821 = vmax.f32 %v813, 0.0
        %v822 = vld [vmem:[%s5] sm:$0x7]
        %v824 = vlaneseq
        %v825 = vshrl.u32 %v824, 7
        %v826 = vsub.s32 0, %v825
        %v827 = vrot.slane %v822, %v826
        %v828 = vlaneseq
        %v829 = vshrl.u32 %v828, 7
        %v830 = vsub.s32 1, %v829
        %v831 = vrot.slane %v822, %v830
        %v832 = vlaneseq
        %v833 = vshrl.u32 %v832, 7
        %v834 = vsub.s32 2, %v833
        %v835 = vrot.slane %v822, %v834
        %v839 = vmul.f32 %v816, %v827
        %v840 = vmul.f32 %v817, %v831
        %v841 = vmul.f32 %v818, %v835
        %v842 = vmul.f32 %v819, %v827
        %v843 = vmul.f32 %v820, %v831
        %v844 = vmul.f32 %v821, %v835
        %v845 = vpack.c.bf16 %v842, %v839
        %v846 = vpack.c.bf16 %v843, %v840
        %v847 = vpack.c.bf16 %v844, %v841
        %851 = vrot.lane.b32.xlu0 %v845, 19
        %v852 = vpop.permute.xlu0 %851
        %853 = vrot.lane.b32.xlu0 %v846, 19
        %v854 = vpop.permute.xlu0 %853
        %855 = vrot.lane.b32.xlu0 %v847, 19
        %v856 = vpop.permute.xlu0 %855
        %vm857 = vcmask 154624
        %v858 = vsel %vm857, %v852, %v854
        %v859 = vsel %vm857, %v854, %v856
        %vm864 = vcmask 1047704
        %865 = vst.msk [vmem:[#allocation4] sm:$0xff] %vm864, %v852
        %866 = vst [vmem:[#allocation4 + $0x8] sm:$0xff] %v858
        %867 = vst [vmem:[#allocation4 + $0x10] sm:$0xff] %v859
        %vm868 = vcmask 154624
        %869 = vst.msk [vmem:[#allocation4 + $0x18] sm:$0xff] %vm868, %v856
        %v870 = vld [vmem:[#allocation4] sm:$0xff]
        %v871 = vld [vmem:[#allocation4 + $0x8] sm:$0xff]
        %v872 = vld [vmem:[#allocation4 + $0x10] sm:$0xff]
        %873 = vst [vmem:[#allocation2] sm:$0xff] %v870
        %874 = vst [vmem:[#allocation2 + $0x8] sm:$0xff] %v871
        %875 = vst [vmem:[#allocation2 + $0x10] sm:$0xff] %v872
        %v876 = vld [vmem:[#allocation4] sm:$0xff]
        %v877 = vld [vmem:[#allocation4 + $0x8] sm:$0xff]
        %v878 = vld [vmem:[#allocation4 + $0x10] sm:$0xff]
        %v879 = vld [vmem:[#allocation4 + $0x18] sm:$0xff]
        %884 = vrot.lane.b32.xlu0 %v876, 127
        %v885 = vpop.permute.xlu0 %884
        %886 = vrot.lane.b32.xlu0 %v877, 127
        %v887 = vpop.permute.xlu0 %886
        %888 = vrot.lane.b32.xlu0 %v878, 127
        %v889 = vpop.permute.xlu0 %888
        %890 = vrot.lane.b32.xlu0 %v879, 127
        %v891 = vpop.permute.xlu0 %890
        %v892 = vsel %vm430, %v885, %v887
        %v893 = vsel %vm430, %v887, %v889
        %v894 = vsel %vm430, %v889, %v891
        %898 = vst [vmem:[#allocation2 + $0x18] sm:$0xff] %v892
        %899 = vst [vmem:[#allocation2 + $0x20] sm:$0xff] %v893
        %900 = vst [vmem:[#allocation2 + $0x28] sm:$0xff] %v894
        %v901 = vld [vmem:[#allocation4] sm:$0xff]
        %v902 = vld [vmem:[#allocation4 + $0x8] sm:$0xff]
        %v903 = vld [vmem:[#allocation4 + $0x10] sm:$0xff]
        %v904 = vld [vmem:[#allocation4 + $0x18] sm:$0xff]
        %909 = vrot.lane.b32.xlu0 %v901, 126
        %v910 = vpop.permute.xlu0 %909
        %911 = vrot.lane.b32.xlu0 %v902, 126
        %v912 = vpop.permute.xlu0 %911
        %913 = vrot.lane.b32.xlu0 %v903, 126
        %v914 = vpop.permute.xlu0 %913
        %915 = vrot.lane.b32.xlu0 %v904, 126
        %v916 = vpop.permute.xlu0 %915
        %v917 = vsel %vm464, %v910, %v912
        %v918 = vsel %vm464, %v912, %v914
        %v919 = vsel %vm464, %v914, %v916
        %923 = vst [vmem:[#allocation2 + $0x30] sm:$0xff] %v917
        %924 = vst [vmem:[#allocation2 + $0x38] sm:$0xff] %v918
        %925 = vst [vmem:[#allocation2 + $0x40] sm:$0xff] %v919
        %v926 = vld [vmem:[#allocation4] sm:$0xff]
        %v927 = vld [vmem:[#allocation4 + $0x8] sm:$0xff]
        %v928 = vld [vmem:[#allocation4 + $0x10] sm:$0xff]
        %v929 = vld [vmem:[#allocation4 + $0x18] sm:$0xff]
        %934 = vrot.lane.b32.xlu0 %v926, 110
        %v935 = vpop.permute.xlu0 %934
        %936 = vrot.lane.b32.xlu0 %v927, 110
        %v937 = vpop.permute.xlu0 %936
        %938 = vrot.lane.b32.xlu0 %v928, 110
        %v939 = vpop.permute.xlu0 %938
        %940 = vrot.lane.b32.xlu0 %v929, 110
        %v941 = vpop.permute.xlu0 %940
        %v942 = vsel %vm498, %v935, %v937
        %v943 = vsel %vm498, %v937, %v939
        %v944 = vsel %vm498, %v939, %v941
        %948 = vst [vmem:[#allocation2 + $0x48] sm:$0xff] %v942
        %949 = vst [vmem:[#allocation2 + $0x50] sm:$0xff] %v943
        %950 = vst [vmem:[#allocation2 + $0x58] sm:$0xff] %v944
        %v951 = vld [vmem:[#allocation4] sm:$0xff]
        %v952 = vld [vmem:[#allocation4 + $0x8] sm:$0xff]
        %v953 = vld [vmem:[#allocation4 + $0x10] sm:$0xff]
        %v954 = vld [vmem:[#allocation4 + $0x18] sm:$0xff]
        %959 = vrot.lane.b32.xlu0 %v951, 109
        %v960 = vpop.permute.xlu0 %959
        %961 = vrot.lane.b32.xlu0 %v952, 109
        %v962 = vpop.permute.xlu0 %961
        %963 = vrot.lane.b32.xlu0 %v953, 109
        %v964 = vpop.permute.xlu0 %963
        %965 = vrot.lane.b32.xlu0 %v954, 109
        %v966 = vpop.permute.xlu0 %965
        %v967 = vsel %vm532, %v960, %v962
        %v968 = vsel %vm532, %v962, %v964
        %v969 = vsel %vm532, %v964, %v966
        %973 = vst [vmem:[#allocation2 + $0x60] sm:$0xff] %v967
        %974 = vst [vmem:[#allocation2 + $0x68] sm:$0xff] %v968
        %975 = vst [vmem:[#allocation2 + $0x70] sm:$0xff] %v969
        %v976 = vld [vmem:[#allocation4] sm:$0xff]
        %v977 = vld [vmem:[#allocation4 + $0x8] sm:$0xff]
        %v978 = vld [vmem:[#allocation4 + $0x10] sm:$0xff]
        %v979 = vld [vmem:[#allocation4 + $0x18] sm:$0xff]
        %984 = vrot.lane.b32.xlu0 %v976, 108
        %v985 = vpop.permute.xlu0 %984
        %986 = vrot.lane.b32.xlu0 %v977, 108
        %v987 = vpop.permute.xlu0 %986
        %988 = vrot.lane.b32.xlu0 %v978, 108
        %v989 = vpop.permute.xlu0 %988
        %990 = vrot.lane.b32.xlu0 %v979, 108
        %v991 = vpop.permute.xlu0 %990
        %v992 = vsel %vm566, %v985, %v987
        %v993 = vsel %vm566, %v987, %v989
        %v994 = vsel %vm566, %v989, %v991
        %998 = vst [vmem:[#allocation2 + $0x78] sm:$0xff] %v992
        %999 = vst [vmem:[#allocation2 + $0x80] sm:$0xff] %v993
        %1000 = vst [vmem:[#allocation2 + $0x88] sm:$0xff] %v994
        %v1001 = vld [vmem:[#allocation4] sm:$0xff]
        %v1002 = vld [vmem:[#allocation4 + $0x8] sm:$0xff]
        %v1003 = vld [vmem:[#allocation4 + $0x10] sm:$0xff]
        %v1004 = vld [vmem:[#allocation4 + $0x18] sm:$0xff]
        %1009 = vrot.lane.b32.xlu0 %v1001, 92
        %v1010 = vpop.permute.xlu0 %1009
        %1011 = vrot.lane.b32.xlu0 %v1002, 92
        %v1012 = vpop.permute.xlu0 %1011
        %1013 = vrot.lane.b32.xlu0 %v1003, 92
        %v1014 = vpop.permute.xlu0 %1013
        %1015 = vrot.lane.b32.xlu0 %v1004, 92
        %v1016 = vpop.permute.xlu0 %1015
        %v1017 = vsel %vm600, %v1010, %v1012
        %v1018 = vsel %vm600, %v1012, %v1014
        %v1019 = vsel %vm600, %v1014, %v1016
        %1023 = vst [vmem:[#allocation2 + $0x90] sm:$0xff] %v1017
        %1024 = vst [vmem:[#allocation2 + $0x98] sm:$0xff] %v1018
        %1025 = vst [vmem:[#allocation2 + $0xa0] sm:$0xff] %v1019
        %v1026 = vld [vmem:[#allocation4] sm:$0xff]
        %v1027 = vld [vmem:[#allocation4 + $0x8] sm:$0xff]
        %v1028 = vld [vmem:[#allocation4 + $0x10] sm:$0xff]
        %v1029 = vld [vmem:[#allocation4 + $0x18] sm:$0xff]
        %1034 = vrot.lane.b32.xlu0 %v1026, 91
        %v1035 = vpop.permute.xlu0 %1034
        %1036 = vrot.lane.b32.xlu0 %v1027, 91
        %v1037 = vpop.permute.xlu0 %1036
        %1038 = vrot.lane.b32.xlu0 %v1028, 91
        %v1039 = vpop.permute.xlu0 %1038
        %1040 = vrot.lane.b32.xlu0 %v1029, 91
        %v1041 = vpop.permute.xlu0 %1040
        %v1042 = vsel %vm634, %v1035, %v1037
        %v1043 = vsel %vm634, %v1037, %v1039
        %v1044 = vsel %vm634, %v1039, %v1041
        %1048 = vst [vmem:[#allocation2 + $0xa8] sm:$0xff] %v1042
        %1049 = vst [vmem:[#allocation2 + $0xb0] sm:$0xff] %v1043
        %1050 = vst [vmem:[#allocation2 + $0xb8] sm:$0xff] %v1044
        %v1051 = vld [vmem:[#allocation4] sm:$0xff]
        %v1052 = vld [vmem:[#allocation4 + $0x8] sm:$0xff]
        %v1053 = vld [vmem:[#allocation4 + $0x10] sm:$0xff]
        %v1054 = vld [vmem:[#allocation4 + $0x18] sm:$0xff]
        %1059 = vrot.lane.b32.xlu0 %v1051, 90
        %v1060 = vpop.permute.xlu0 %1059
        %1061 = vrot.lane.b32.xlu0 %v1052, 90
        %v1062 = vpop.permute.xlu0 %1061
        %1063 = vrot.lane.b32.xlu0 %v1053, 90
        %v1064 = vpop.permute.xlu0 %1063
        %1065 = vrot.lane.b32.xlu0 %v1054, 90
        %v1066 = vpop.permute.xlu0 %1065
        %v1067 = vsel %vm668, %v1060, %v1062
        %v1068 = vsel %vm668, %v1062, %v1064
        %v1069 = vsel %vm668, %v1064, %v1066
        %1073 = vst [vmem:[#allocation2 + $0xc0] sm:$0xff] %v1067
        %1074 = vst [vmem:[#allocation2 + $0xc8] sm:$0xff] %v1068
        %1075 = vst [vmem:[#allocation2 + $0xd0] sm:$0xff] %v1069
        %v1076 = vld [vmem:[#allocation5] sm:$0xff]
        %v1077 = vld [vmem:[#allocation5 + $0x8] sm:$0xff]
        %v1078 = vld [vmem:[#allocation2] sm:$0xff]
        %v1079 = vld [vmem:[#allocation2 + $0x8] sm:$0xff]
        %v1080 = vld [vmem:[#allocation2 + $0x10] sm:$0xff]
        %v1081 = vld [vmem:[#allocation2 + $0x18] sm:$0xff]
        %v1082 = vld [vmem:[#allocation2 + $0x20] sm:$0xff]
        %v1083 = vld [vmem:[#allocation2 + $0x28] sm:$0xff]
        %v1084 = vld [vmem:[#allocation2 + $0x30] sm:$0xff]
        %v1085 = vld [vmem:[#allocation2 + $0x38] sm:$0xff]
        %v1086 = vld [vmem:[#allocation2 + $0x40] sm:$0xff]
        %v1087 = vld [vmem:[#allocation2 + $0x48] sm:$0xff]
        %v1088 = vld [vmem:[#allocation2 + $0x50] sm:$0xff]
        %v1089 = vld [vmem:[#allocation2 + $0x58] sm:$0xff]
        %v1090 = vld [vmem:[#allocation2 + $0x60] sm:$0xff]
        %v1091 = vld [vmem:[#allocation2 + $0x68] sm:$0xff]
        %v1092 = vld [vmem:[#allocation2 + $0x70] sm:$0xff]
        %v1093 = vld [vmem:[#allocation2 + $0x78] sm:$0xff]
        %v1094 = vld [vmem:[#allocation2 + $0x80] sm:$0xff]
        %v1095 = vld [vmem:[#allocation2 + $0x88] sm:$0xff]
        %v1096 = vld [vmem:[#allocation2 + $0x90] sm:$0xff]
        %v1097 = vld [vmem:[#allocation2 + $0x98] sm:$0xff]
        %v1098 = vld [vmem:[#allocation2 + $0xa0] sm:$0xff]
        %v1099 = vld [vmem:[#allocation2 + $0xa8] sm:$0xff]
        %v1100 = vld [vmem:[#allocation2 + $0xb0] sm:$0xff]
        %v1101 = vld [vmem:[#allocation2 + $0xb8] sm:$0xff]
        %v1102 = vld [vmem:[#allocation2 + $0xc0] sm:$0xff]
        %v1103 = vld [vmem:[#allocation2 + $0xc8] sm:$0xff]
        %v1104 = vld [vmem:[#allocation2 + $0xd0] sm:$0xff]
        %v1105 = vld [vmem:[#allocation3] sm:$0xff]
        %v1106 = vld [vmem:[#allocation3 + $0x8] sm:$0xff]
        %v1107 = vld [vmem:[#allocation3 + $0x10] sm:$0xff]
        %v1108 = vld [vmem:[#allocation3 + $0x18] sm:$0xff]
        %v1109 = vld [vmem:[#allocation3 + $0x20] sm:$0xff]
        %v1110 = vld [vmem:[#allocation3 + $0x28] sm:$0xff]
        %v1111 = vld [vmem:[#allocation3 + $0x30] sm:$0xff]
        %v1112 = vld [vmem:[#allocation3 + $0x38] sm:$0xff]
        %v1113 = vld [vmem:[%s4] sm:$0xff]
        %v1114 = vld [vmem:[%s4 + $0x8] sm:$0xff]
        %1116 = vset.pattern.permute.xlu0 0
        %1117 = vperm.xlu0 %1116, %v1113
        %v1118 = vpop.permute.xlu0 %1117
        %1121 = vset.pattern.permute.xlu0 0
        %1122 = vperm.xlu0 %1121, %v1114
        %v1123 = vpop.permute.xlu0 %1122
        %v1127 = vunpack.c.l.b16 %v1076
        %v1128 = vunpack.c.h.b16 %v1076
        %v1129 = vunpack.c.l.b16 %v1077
        %v1130 = vunpack.c.h.b16 %v1077
        %v1131 = vpack.c.b16 %v1129, %v1127
        %v1132 = vpack.c.b16 %v1130, %v1128
        %v1135 = vsel %vm728, %v1132, 0
        %1137 = vmatprep.subr.bf16.mxu0 %v1079
        %1138 = vmatpush1.bf16.msra.mxu0 %v1078
        %1139 = vmatprep.subr.bf16.mxu0 %v1082
        %1140 = vmatpush1.bf16.msra.mxu0 %v1081
        %1141 = vmatprep.subr.bf16.mxu0 %v1085
        %1142 = vmatpush1.bf16.msra.mxu0 %v1084
        %1143 = vmatprep.subr.bf16.mxu0 %v1088
        %1144 = vmatpush1.bf16.msra.mxu0 %v1087
        %1145 = vmatprep.subr.bf16.mxu0 %v1091
        %1146 = vmatpush1.bf16.msra.mxu0 %v1090
        %1147 = vmatprep.subr.bf16.mxu0 %v1094
        %1148 = vmatpush1.bf16.msra.mxu0 %v1093
        %1149 = vmatprep.subr.bf16.mxu0 %v1097
        %1150 = vmatpush1.bf16.msra.mxu0 %v1096
        %1151 = vmatprep.subr.bf16.mxu0 %v1100
        %1152 = vmatpush1.bf16.msra.mxu0 %v1099
        %1153 = vmatprep.subr.bf16.mxu0 %v1103
        %1154 = vmatpush1.bf16.msra.mxu0 %v1102
        %1155 = vmatprep.subr.bf16.mxu0 0
        %1156 = vmatpush1.bf16.msra.mxu0 0
        %1157 = vmatprep.subr.bf16.mxu0 0
        %1158 = vmatpush1.bf16.msra.mxu0 0
        %1159 = vmatprep.subr.bf16.mxu0 0
        %1160 = vmatpush1.bf16.msra.mxu0 0
        %1161 = vmatprep.subr.bf16.mxu0 0
        %1162 = vmatpush1.bf16.msra.mxu0 0
        %1163 = vmatprep.subr.bf16.mxu0 0
        %1164 = vmatpush1.bf16.msra.mxu0 0
        %1165 = vmatprep.subr.bf16.mxu0 0
        %1166 = vmatpush1.bf16.msra.mxu0 0
        %1167 = vmatprep.subr.bf16.mxu0 0
        %1168 = vmatpush1.bf16.msra.mxu0 0
        %1169 = vmatprep.mubr.bf16.mxu0 %v1135
        %1170 = vmatmul.mubr.bf16.gmra.mrb[0].mxu0 %v1131
        %v1171 = vpop.f32.mrb[0].mxu0
        %v1172 = vadd.f32 %v1118, %v1171
        %v1173 = vpop.f32.mrb[0].mxu0
        %v1174 = vadd.f32 %v1118, %v1173
        %v1175 = vpop.f32.mrb[0].mxu0
        %v1176 = vadd.f32 %v1123, %v1175
        %v1177 = vpop.f32.mrb[0].mxu0
        %v1178 = vadd.f32 %v1123, %v1177
        %1179 = vdwg.mxu0
        %1180 = vmatprep.subr.bf16.mxu0 0
        %1181 = vmatpush1.bf16.msra.mxu0 %v1080
        %1182 = vmatprep.subr.bf16.mxu0 0
        %1183 = vmatpush1.bf16.msra.mxu0 %v1083
        %1184 = vmatprep.subr.bf16.mxu0 0
        %1185 = vmatpush1.bf16.msra.mxu0 %v1086
        %1186 = vmatprep.subr.bf16.mxu0 0
        %1187 = vmatpush1.bf16.msra.mxu0 %v1089
        %1188 = vmatprep.subr.bf16.mxu0 0
        %1189 = vmatpush1.bf16.msra.mxu0 %v1092
        %1190 = vmatprep.subr.bf16.mxu0 0
        %1191 = vmatpush1.bf16.msra.mxu0 %v1095
        %1192 = vmatprep.subr.bf16.mxu0 0
        %1193 = vmatpush1.bf16.msra.mxu0 %v1098
        %1194 = vmatprep.subr.bf16.mxu0 0
        %1195 = vmatpush1.bf16.msra.mxu0 %v1101
        %1196 = vmatprep.subr.bf16.mxu0 0
        %1197 = vmatpush1.bf16.msra.mxu0 %v1104
        %1198 = vmatprep.subr.bf16.mxu0 0
        %1199 = vmatpush1.bf16.msra.mxu0 0
        %1200 = vmatprep.subr.bf16.mxu0 0
        %1201 = vmatpush1.bf16.msra.mxu0 0
        %1202 = vmatprep.subr.bf16.mxu0 0
        %1203 = vmatpush1.bf16.msra.mxu0 0
        %1204 = vmatprep.subr.bf16.mxu0 0
        %1205 = vmatpush1.bf16.msra.mxu0 0
        %1206 = vmatprep.subr.bf16.mxu0 0
        %1207 = vmatpush1.bf16.msra.mxu0 0
        %1208 = vmatprep.subr.bf16.mxu0 0
        %1209 = vmatpush1.bf16.msra.mxu0 0
        %1210 = vmatprep.subr.bf16.mxu0 0
        %1211 = vmatpush1.bf16.msra.mxu0 0
        %1212 = vmatprep.mubr.bf16.mxu0 %v1135
        %1213 = vmatmul.mubr.bf16.gmra.mrb[0].mxu0 %v1131
        %v1214 = vpop.f32.mrb[0].mxu0
        %v1215 = vadd.f32 %v1118, %v1214
        %v1216 = vpop.f32.mrb[0].mxu0
        %v1217 = vpop.f32.mrb[0].mxu0
        %v1218 = vadd.f32 %v1123, %v1217
        %v1219 = vpop.f32.mrb[0].mxu0
        %1220 = vdwg.mxu0
        %1229 = vrot.lane.b32.xlu0 %v1105, 109
        %v1230 = vpop.permute.xlu0 %1229
        %1231 = vrot.lane.b32.xlu0 %v1106, 109
        %v1232 = vpop.permute.xlu0 %1231
        %1233 = vrot.lane.b32.xlu0 %v1107, 109
        %v1234 = vpop.permute.xlu0 %1233
        %1235 = vrot.lane.b32.xlu0 %v1108, 109
        %v1236 = vpop.permute.xlu0 %1235
        %1237 = vrot.lane.b32.xlu0 %v1109, 109
        %v1238 = vpop.permute.xlu0 %1237
        %1239 = vrot.lane.b32.xlu0 %v1110, 109
        %v1240 = vpop.permute.xlu0 %1239
        %1241 = vrot.lane.b32.xlu0 %v1111, 109
        %v1242 = vpop.permute.xlu0 %1241
        %1243 = vrot.lane.b32.xlu0 %v1112, 109
        %v1244 = vpop.permute.xlu0 %1243
        %vm1245 = vcmask 891904
        %v1246 = vsel %vm1245, %v1230, %v1232
        %v1247 = vsel %vm1245, %v1232, %v1234
        %v1248 = vsel %vm1245, %v1234, %v1236
        %v1249 = vsel %vm1245, %v1238, %v1240
        %v1250 = vsel %vm1245, %v1240, %v1242
        %v1251 = vsel %vm1245, %v1242, %v1244
        %v1258 = vadd.f32 %v1172, %v1246
        %v1259 = vadd.f32 %v1174, %v1247
        %v1260 = vadd.f32 %v1215, %v1248
        %v1261 = vadd.f32 %v1176, %v1249
        %v1262 = vadd.f32 %v1178, %v1250
        %v1263 = vadd.f32 %v1218, %v1251
        %v1264 = vmax.f32 %v1258, 0.0
        %v1265 = vmax.f32 %v1259, 0.0
        %v1266 = vmax.f32 %v1260, 0.0
        %v1267 = vmax.f32 %v1261, 0.0
        %v1268 = vmax.f32 %v1262, 0.0
        %v1269 = vmax.f32 %v1263, 0.0
        %1270 = vst [vmem:[%s259] sm:$0xff] %v1264
        %1271 = vst [vmem:[%s259 + $0x8] sm:$0xff] %v1265
        %1272 = vst [vmem:[%s259 + $0x10] sm:$0xff] %v1266
        %1273 = vst [vmem:[%s259 + $0x18] sm:$0xff] %v1267
        %1274 = vst [vmem:[%s259 + $0x20] sm:$0xff] %v1268
        %1275 = vst [vmem:[%s259 + $0x28] sm:$0xff] %v1269
        %s1276 = sand.u32 %s160, 1
        %s1277 = scalar_lea.sflag [#allocation7], %s1276
        %s1278 = sand.u32 %s160, 1
        %s1279 = smul.addr %s1278, 48
        %s1280 = scalar_lea.vmem [#allocation8], %s1279
        // Predicated region
        $region49: #{tpu_custom_call.1} parent=43 // pred_check
          %p1281 = pneg %p170
        $region50: #{tpu_custom_call.1} parent=43 // pred_check_branch
          %1283 = sbr.rel (%p1281) target = $region52
        $region51: #{tpu_custom_call.1} parent=43 // pred_region
          %s1285 = ssub.s32 768, 768
          %1286 = vsyncadd %s1277, %s1285
          %s1287 = smul.addr %s21, 6
          %s1288 = smul.addr %s1287, 128
          %s1289 = scalar_lea.hbm %s6, %s1288
          %s1290 = sshll.u32 %s1280, 4
          %s1291 = int_to_ptr.vmem [resolvable:$true] %s1290
          %1296 = dma.vmem_to_hbm [thread:$0]  %s1291, 768, %s1289, %s1277, 384, 384, 24
        $region52: #{tpu_custom_call.1} parent=43 // pred_fallthru
          _
      $region44: #{tpu_custom_call.1} parent=5 // pred_fallthru
        _
      %p1297 = scmp.le.s32.totalorder 2, %s16
      // Predicated region
      $region53: #{tpu_custom_call.1} parent=5 // pred_check
        %p1298 = pneg %p1297
      $region54: #{tpu_custom_call.1} parent=5 // pred_check_branch
        %1300 = sbr.rel (%p1298) target = $region56
      $region55: #{tpu_custom_call.1} parent=5 // pred_region
        %s1301 = ssub.s32 %s16, 2
        // Predicated region
        $region57: #{tpu_custom_call.1} parent=55 // pred_check
          %p1302 = pneg %p176
        $region58: #{tpu_custom_call.1} parent=55 // pred_check_branch
          %1304 = sbr.rel (%p1302) target = $region60
        $region59: #{tpu_custom_call.1} parent=55 // pred_region
          %s1305 = sand.u32 %s161, 1
          %s1306 = scalar_lea.sflag [#allocation7], %s1305
          %s1307 = sand.u32 %s161, 1
          %s1308 = smul.addr %s1307, 48
          %s1309 = scalar_lea.vmem [#allocation8], %s1308
          %1310 = dma.done %s1306, 768
        $region60: #{tpu_custom_call.1} parent=55 // pred_fallthru
          _
      $region56: #{tpu_custom_call.1} parent=5 // pred_fallthru
        _
    $region6: #{tpu_custom_call.1} parent=1 // loop_footer
      %s20 = sadd.s32 1, %s16
    $region7: #{tpu_custom_call.1} parent=1 // loop_footer_branch
      %15 = sbr.rel target = $region3
    $region8: #{tpu_custom_call.1} parent=1 // loop_exit
      _
    %1311 = vsyncpa [#allocation6], 1
    %s1312 = scalar_lea.sflag [#allocation6], 1
    %1313 = vsyncpa %s1312, 1
    %1314 = vsyncpa [#allocation7], 1
    %s1315 = scalar_lea.sflag [#allocation7], 1
    %1316 = vsyncpa %s1315, 1

</llo_original>
